<compile_context>
chip_gen: v6e
topology: v6e:2x2x1
jax: 0.10.0
libtpu: 0.0.40
codegen_flags: <defaults>
</compile_context>

<pallas_src>
import functools

import jax
import jax.numpy as jnp
from jax.experimental import pallas as pl
from jax.experimental.pallas import tpu as pltpu

HIDDEN = 400  # fixed by the module definition
LANE = 128


def _round_up(n, m):
    return ((n + m - 1) // m) * m


def _vae_kernel(x_ref,
                w1_ref, b1_ref,
                wh_ref, bh_ref,
                w3_ref, b3_ref,
                w4_ref, b4_ref,
                out_ref, *, d, z_dim):
    xin = x_ref[...]                                   # (TB, W) bf16: x | cumsum(eps) | 0
    col = jax.lax.broadcasted_iota(jnp.int32, xin.shape, 1)

    # ---- encode: h1 = relu(fc1(x)); w1 rows >= d are zero, so the eps lanes are inert ----
    h1 = jnp.dot(xin, w1_ref[...], preferred_element_type=jnp.float32) + b1_ref[...]
    h1 = jnp.maximum(h1, 0.0)
    h1b = h1.astype(jnp.bfloat16)

    # fused heads, lane-aligned at offset d: [d,d+z) = mu, d+z = rho(pre-tanh), d+z+1 = logs
    heads = jnp.dot(h1b, wh_ref[...], preferred_element_type=jnp.float32) + bh_ref[...]

    # extract the per-row scalar columns via select + lane reduce; f32 transcendentals
    logs = jnp.sum(jnp.where(col == d + z_dim + 1, heads, 0.0), axis=1, keepdims=True)
    rho_raw = jnp.sum(jnp.where(col == d + z_dim, heads, 0.0), axis=1, keepdims=True)
    std = jnp.exp(0.5 * logs)                          # == sqrt(exp(logs))
    rho = jnp.tanh(rho_raw)                            # only the one real column

    # ---- reparameterize: z = mu + cumsum(eps) * std, already sitting at lanes [d, d+z) ----
    z_mask = (col >= d) & (col < d + z_dim)
    cum = jnp.where(z_mask, xin.astype(jnp.float32), 0.0)
    z = jnp.where(z_mask, heads + cum * std, 0.0)      # explicit mask: no junk lanes

    # ---- decode: fc3 rows outside [d, d+z) and fc4 cols >= d are zero-padded ----
    h3 = jnp.dot(z.astype(jnp.bfloat16), w3_ref[...],
                 preferred_element_type=jnp.float32) + b3_ref[...]
    h3 = jnp.maximum(h3, 0.0)
    logits = jnp.dot(h3.astype(jnp.bfloat16), w4_ref[...],
                     preferred_element_type=jnp.float32) + b4_ref[...]
    recon = jax.nn.sigmoid(logits)                     # real data in cols [0, d)

    # one packed lane-dense store: recon | mu | tanh(rho) | logs | 0
    head_out = jnp.where(col == d + z_dim, rho, heads)
    out_ref[...] = jnp.where(col < d, recon, head_out)


def _choose_tile_b(batch, w, hpad, budget_bytes=20 << 20):
    """Largest batch tile that keeps double-buffered I/O slabs + intermediates + weights
    under a VMEM budget that is safe on every generation (v7x 64 MiB, v5e/v6e 128 MiB)."""
    bf16, f32 = 2, 4
    per_row = (2 * bf16 * w + 2 * f32 * w               # double-buffered in/out slabs
               + f32 * (2 * hpad + 3 * w)               # h1/h3 + heads/z/logits (f32)
               + bf16 * (2 * hpad + w))                 # bf16 casts of h1/h3/z
    weights = 2 * (bf16 * (2 * w * hpad + 2 * hpad * w) + f32 * (2 * hpad + 2 * w))
    avail = max(budget_bytes - weights, per_row * 8)
    tile = int((avail // per_row) // 8 * 8)
    tile = max(8, min(1024, tile))
    # v7x megacore: keep >= 2 grid steps whenever the batch allows it
    tile = min(tile, max(8, _round_up(-(-batch // 2), 8)))
    return min(tile, _round_up(batch, 8))


def _vmem_estimate(tile_b, w, hpad):
    bf16, f32 = 2, 4
    weights = 2 * (bf16 * (2 * w * hpad + 2 * hpad * w) + f32 * (2 * hpad + 2 * w))
    io = tile_b * (2 * bf16 * w + 2 * f32 * w)
    inter = tile_b * (f32 * (2 * hpad + 3 * w) + bf16 * (2 * hpad + w))
    return weights + io + inter


def rho_vanilla_vae_forward(x, eps, params, *, tile_b=None):
    """Full VAE forward in one batch-gridded Pallas kernel.

    Returns (recon, mu, rho, logs) matching the PyTorch module's forward, given the
    standard-normal draws `eps` (one column per torch.randn_like call).
    """
    B, D = x.shape
    Z = eps.shape[1]
    H = params["w1"].shape[1]

    W = _round_up(D + Z + 2, LANE)    # packed slab width: x/recon in [0,D), heads/eps at [D,D+Z+2)
    HPAD = _round_up(H, LANE)         # 400 -> 512, explicit zero padding keeps lanes dense

    f32, bf16 = jnp.float32, jnp.bfloat16

    # zero-padded, lane-dense parameters: bf16 weights (MXU operands), f32 biases.
    # The three encoder heads are fused and placed directly at lane offset D.
    w1p = jnp.zeros((W, HPAD), f32).at[:D, :H].set(params["w1"]).astype(bf16)
    b1p = jnp.zeros((1, HPAD), f32).at[:, :H].set(params["b1"])
    whp = (jnp.zeros((HPAD, W), f32)
           .at[:H, D:D + Z].set(params["w21"])
           .at[:H, D + Z:D + Z + 1].set(params["w22"])
           .at[:H, D + Z + 1:D + Z + 2].set(params["w23"])).astype(bf16)
    bhp = (jnp.zeros((1, W), f32)
           .at[:, D:D + Z].set(params["b21"])
           .at[:, D + Z:D + Z + 1].set(params["b22"])
           .at[:, D + Z + 1:D + Z + 2].set(params["b23"]))
    w3p = jnp.zeros((W, HPAD), f32).at[D:D + Z, :H].set(params["w3"]).astype(bf16)
    b3p = jnp.zeros((1, HPAD), f32).at[:, :H].set(params["b3"])
    w4p = jnp.zeros((HPAD, W), f32).at[:H, :D].set(params["w4"]).astype(bf16)
    b4p = jnp.zeros((1, W), f32).at[:, :D].set(params["b4"])

    if tile_b is None:
        tile_b = _choose_tile_b(B, W, HPAD)
    BPAD = _round_up(max(B, tile_b), tile_b)

    # packed input slab: x | cumsum(eps)  (the reparameterize running sum, hoisted here)
    cum_eps = jnp.cumsum(eps.astype(f32), axis=1)
    xin = (jnp.zeros((BPAD, W), f32)
           .at[:B, :D].set(x)
           .at[:B, D:D + Z].set(cum_eps)).astype(bf16)

    grid = (BPAD // tile_b,)
    tiled = pl.BlockSpec((tile_b, W), lambda i: (i, 0))
    whole = lambda a: pl.BlockSpec(a.shape, lambda i: (0, 0))

    vmem_limit = int(min(48 << 20, max(16 << 20, 2 * _vmem_estimate(tile_b, W, HPAD))))

    out = pl.pallas_call(
        functools.partial(_vae_kernel, d=D, z_dim=Z),
        out_shape=jax.ShapeDtypeStruct((BPAD, W), f32),
        grid_spec=pltpu.PrefetchScalarGridSpec(
            num_scalar_prefetch=0,
            grid=grid,
            in_specs=[tiled,
                      whole(w1p), whole(b1p),
                      whole(whp), whole(bhp),
                      whole(w3p), whole(b3p),
                      whole(w4p), whole(b4p)],
            out_specs=tiled,
        ),
        compiler_params=pltpu.CompilerParams(
            dimension_semantics=("parallel",),
            vmem_limit_bytes=vmem_limit,
        ),
    )(xin, w1p, b1p, whp, bhp, w3p, b3p, w4p, b4p)

    recon = out[:B, :D]
    mu = out[:B, D:D + Z]
    rho = out[:B, D + Z:D + Z + 1]
    logs = out[:B, D + Z + 1:D + Z + 2]
    return recon, mu, rho, logs


def init_params(key, data_dim, z_dim):
    """Deterministic params mimicking nn.Linear's U(-1/sqrt(fan_in), 1/sqrt(fan_in))
    init.  Weights stored as (in_features, out_features)."""
    def linear(k, fan_in, fan_out):
        kw, kb = jax.random.split(k)
        bound = 1.0 / jnp.sqrt(jnp.float32(fan_in))
        w = jax.random.uniform(kw, (fan_in, fan_out), jnp.float32, -bound, bound)
        b = jax.random.uniform(kb, (1, fan_out), jnp.float32, -bound, bound)
        return w, b

    k1, k21, k22, k23, k3, k4 = jax.random.split(key, 6)
    p = {}
    p["w1"], p["b1"] = linear(k1, data_dim, HIDDEN)
    p["w21"], p["b21"] = linear(k21, HIDDEN, z_dim)
    p["w22"], p["b22"] = linear(k22, HIDDEN, 1)
    p["w23"], p["b23"] = linear(k23, HIDDEN, 1)
    p["w3"], p["b3"] = linear(k3, z_dim, HIDDEN)
    p["w4"], p["b4"] = linear(k4, HIDDEN, data_dim)
    return p


def reference_forward(x, eps, params):
    """Pure-JAX f32 reference mirroring the PyTorch semantics exactly."""
    h1 = jnp.maximum(x @ params["w1"] + params["b1"], 0.0)
    mu = h1 @ params["w21"] + params["b21"]
    rho = jnp.tanh(h1 @ params["w22"] + params["b22"])
    logs = h1 @ params["w23"] + params["b23"]
    std = jnp.sqrt(jnp.exp(logs))
    z = mu + jnp.cumsum(eps, axis=1) * std
    h3 = jnp.maximum(z @ params["w3"] + params["b3"], 0.0)
    recon = jax.nn.sigmoid(h3 @ params["w4"] + params["b4"])
    return recon, mu, rho, logs


if __name__ == "__main__":
    data_dim = 64
    z_dim = 8
    batch = 8

    key = jax.random.PRNGKey(0)
    k_params, k_x, k_eps = jax.random.split(key, 3)

    params = init_params(k_params, data_dim, z_dim)
    x = jax.random.uniform(k_x, (batch, data_dim), jnp.float32)  # e.g. flattened pixels
    # One standard-normal column per torch.randn_like(rho) call in reparameterize.
    eps = jax.random.normal(k_eps, (batch, z_dim), jnp.float32)

    recon, mu, rho, logs = jax.block_until_ready(
        rho_vanilla_vae_forward(x, eps, params))

    r_recon, r_mu, r_rho, r_logs = reference_forward(x, eps, params)
    assert recon.shape == (batch, data_dim)
    assert mu.shape == (batch, z_dim)
    assert rho.shape == (batch, 1) and logs.shape == (batch, 1)
    # bf16 matmul operands with f32 accumulation -> relaxed tolerances vs the f32 reference
    assert jnp.allclose(recon, r_recon, rtol=3e-2, atol=3e-2)
    assert jnp.allclose(mu, r_mu, rtol=3e-2, atol=3e-2)
    assert jnp.allclose(rho, r_rho, rtol=3e-2, atol=3e-2)
    assert jnp.allclose(logs, r_logs, rtol=3e-2, atol=3e-2)

    print("KERNEL_OK")
</pallas_src>

<mosaic_0001>
module attributes {stable_mosaic.version = 11 : i64} {
  func.func @_vae_kernel(%arg0: i32, %arg1: memref<8x128xbf16, #tpu.memory_space<vmem>>, %arg2: memref<128x512xbf16, #tpu.memory_space<vmem>>, %arg3: memref<1x512xf32, #tpu.memory_space<vmem>>, %arg4: memref<512x128xbf16, #tpu.memory_space<vmem>>, %arg5: memref<1x128xf32, #tpu.memory_space<vmem>>, %arg6: memref<128x512xbf16, #tpu.memory_space<vmem>>, %arg7: memref<1x512xf32, #tpu.memory_space<vmem>>, %arg8: memref<512x128xbf16, #tpu.memory_space<vmem>>, %arg9: memref<1x128xf32, #tpu.memory_space<vmem>>, %arg10: memref<8x128xf32, #tpu.memory_space<vmem>>) attributes {dimension_semantics = [#tpu.dimension_semantics<parallel>], iteration_bounds = array<i64: 1>, scalar_prefetch = 0 : i64, scratch_operands = 0 : i64, tpu.core_type = #tpu.core_type<tc>, window_params = [{transform_indices = @transform_0, window_bounds = array<i64: 8, 128>}, {pipeline_mode = #tpu.pipeline_mode<synchronous>, transform_indices = @transform_1, window_bounds = array<i64: 128, 512>}, {pipeline_mode = #tpu.pipeline_mode<synchronous>, transform_indices = @transform_2, window_bounds = array<i64: 1, 512>}, {pipeline_mode = #tpu.pipeline_mode<synchronous>, transform_indices = @transform_3, window_bounds = array<i64: 512, 128>}, {pipeline_mode = #tpu.pipeline_mode<synchronous>, transform_indices = @transform_4, window_bounds = array<i64: 1, 128>}, {pipeline_mode = #tpu.pipeline_mode<synchronous>, transform_indices = @transform_5, window_bounds = array<i64: 128, 512>}, {pipeline_mode = #tpu.pipeline_mode<synchronous>, transform_indices = @transform_6, window_bounds = array<i64: 1, 512>}, {pipeline_mode = #tpu.pipeline_mode<synchronous>, transform_indices = @transform_7, window_bounds = array<i64: 512, 128>}, {pipeline_mode = #tpu.pipeline_mode<synchronous>, transform_indices = @transform_8, window_bounds = array<i64: 1, 128>}, {transform_indices = @transform_9, window_bounds = array<i64: 8, 128>}]} {
    %c0 = arith.constant 0 : index
    %c0_0 = arith.constant 0 : index
    %0 = vector.load %arg1[%c0, %c0_0] : memref<8x128xbf16, #tpu.memory_space<vmem>>, vector<8x128xbf16>
    %1 = tpu.iota {dimensions = array<i32: 1>} : vector<8x128xi32>
    %c0_1 = arith.constant 0 : index
    %c0_2 = arith.constant 0 : index
    %2 = vector.load %arg2[%c0_1, %c0_2] : memref<128x512xbf16, #tpu.memory_space<vmem>>, vector<128x512xbf16>
    %cst = arith.constant dense<0.000000e+00> : vector<8x512xf32>
    %3 = tpu.matmul %0, %2, %cst {dimension_numbers = #tpu.dot_dimension_numbers<[1], [0], [0], [1], [0, 0, 1, 1], [], []>} : vector<8x128xbf16>, vector<128x512xbf16>, vector<8x512xf32> -> vector<8x512xf32>
    %c0_3 = arith.constant 0 : index
    %c0_4 = arith.constant 0 : index
    %4 = vector.load %arg3[%c0_3, %c0_4] : memref<1x512xf32, #tpu.memory_space<vmem>>, vector<1x512xf32>
    %5 = vector.broadcast %4 : vector<1x512xf32> to vector<8x512xf32>
    %6 = arith.addf %3, %5 : vector<8x512xf32>
    %cst_5 = arith.constant 0.000000e+00 : f32
    %7 = vector.broadcast %cst_5 : f32 to vector<8x512xf32>
    %8 = arith.maximumf %6, %7 : vector<8x512xf32>
    %9 = arith.truncf %8 : vector<8x512xf32> to vector<8x512xbf16>
    %c0_6 = arith.constant 0 : index
    %c0_7 = arith.constant 0 : index
    %10 = vector.load %arg4[%c0_6, %c0_7] : memref<512x128xbf16, #tpu.memory_space<vmem>>, vector<512x128xbf16>
    %cst_8 = arith.constant dense<0.000000e+00> : vector<8x128xf32>
    %11 = tpu.matmul %9, %10, %cst_8 {dimension_numbers = #tpu.dot_dimension_numbers<[1], [0], [0], [1], [0, 0, 1, 1], [], []>} : vector<8x512xbf16>, vector<512x128xbf16>, vector<8x128xf32> -> vector<8x128xf32>
    %c0_9 = arith.constant 0 : index
    %c0_10 = arith.constant 0 : index
    %12 = vector.load %arg5[%c0_9, %c0_10] : memref<1x128xf32, #tpu.memory_space<vmem>>, vector<1x128xf32>
    %13 = vector.broadcast %12 : vector<1x128xf32> to vector<8x128xf32>
    %14 = arith.addf %11, %13 : vector<8x128xf32>
    %c73_i32 = arith.constant 73 : i32
    %15 = vector.broadcast %c73_i32 : i32 to vector<8x128xi32>
    %16 = arith.cmpi eq, %1, %15 : vector<8x128xi32>
    %cst_11 = arith.constant 0.000000e+00 : f32
    %17 = vector.broadcast %cst_11 : f32 to vector<8x128xf32>
    %18 = arith.select %16, %14, %17 : vector<8x128xi1>, vector<8x128xf32>
    %cst_12 = arith.constant dense<0.000000e+00> : vector<8xf32>
    %19 = vector.multi_reduction <add>, %18, %cst_12 [1] : vector<8x128xf32> to vector<8xf32>
    %20 = vector.shape_cast %19 : vector<8xf32> to vector<8x1xf32>
    %c72_i32 = arith.constant 72 : i32
    %21 = vector.broadcast %c72_i32 : i32 to vector<8x128xi32>
    %22 = arith.cmpi eq, %1, %21 : vector<8x128xi32>
    %cst_13 = arith.constant 0.000000e+00 : f32
    %23 = vector.broadcast %cst_13 : f32 to vector<8x128xf32>
    %24 = arith.select %22, %14, %23 : vector<8x128xi1>, vector<8x128xf32>
    %cst_14 = arith.constant dense<0.000000e+00> : vector<8xf32>
    %25 = vector.multi_reduction <add>, %24, %cst_14 [1] : vector<8x128xf32> to vector<8xf32>
    %26 = vector.shape_cast %25 : vector<8xf32> to vector<8x1xf32>
    %cst_15 = arith.constant 5.000000e-01 : f32
    %27 = vector.broadcast %cst_15 : f32 to vector<8x1xf32>
    %28 = arith.mulf %27, %20 : vector<8x1xf32>
    %29 = math.exp %28 : vector<8x1xf32>
    %30 = math.tanh %26 : vector<8x1xf32>
    %c64_i32 = arith.constant 64 : i32
    %31 = vector.broadcast %c64_i32 : i32 to vector<8x128xi32>
    %32 = arith.cmpi sge, %1, %31 : vector<8x128xi32>
    %c72_i32_16 = arith.constant 72 : i32
    %33 = vector.broadcast %c72_i32_16 : i32 to vector<8x128xi32>
    %34 = arith.cmpi slt, %1, %33 : vector<8x128xi32>
    %35 = arith.andi %32, %34 : vector<8x128xi1>
    %36 = arith.extf %0 : vector<8x128xbf16> to vector<8x128xf32>
    %cst_17 = arith.constant 0.000000e+00 : f32
    %37 = vector.broadcast %cst_17 : f32 to vector<8x128xf32>
    %38 = arith.select %35, %36, %37 : vector<8x128xi1>, vector<8x128xf32>
    %39 = vector.broadcast %29 : vector<8x1xf32> to vector<8x128xf32>
    %40 = arith.mulf %38, %39 : vector<8x128xf32>
    %41 = arith.addf %14, %40 : vector<8x128xf32>
    %cst_18 = arith.constant 0.000000e+00 : f32
    %42 = vector.broadcast %cst_18 : f32 to vector<8x128xf32>
    %43 = arith.select %35, %41, %42 : vector<8x128xi1>, vector<8x128xf32>
    %44 = arith.truncf %43 : vector<8x128xf32> to vector<8x128xbf16>
    %c0_19 = arith.constant 0 : index
    %c0_20 = arith.constant 0 : index
    %45 = vector.load %arg6[%c0_19, %c0_20] : memref<128x512xbf16, #tpu.memory_space<vmem>>, vector<128x512xbf16>
    %cst_21 = arith.constant dense<0.000000e+00> : vector<8x512xf32>
    %46 = tpu.matmul %44, %45, %cst_21 {dimension_numbers = #tpu.dot_dimension_numbers<[1], [0], [0], [1], [0, 0, 1, 1], [], []>} : vector<8x128xbf16>, vector<128x512xbf16>, vector<8x512xf32> -> vector<8x512xf32>
    %c0_22 = arith.constant 0 : index
    %c0_23 = arith.constant 0 : index
    %47 = vector.load %arg7[%c0_22, %c0_23] : memref<1x512xf32, #tpu.memory_space<vmem>>, vector<1x512xf32>
    %48 = vector.broadcast %47 : vector<1x512xf32> to vector<8x512xf32>
    %49 = arith.addf %46, %48 : vector<8x512xf32>
    %cst_24 = arith.constant 0.000000e+00 : f32
    %50 = vector.broadcast %cst_24 : f32 to vector<8x512xf32>
    %51 = arith.maximumf %49, %50 : vector<8x512xf32>
    %52 = arith.truncf %51 : vector<8x512xf32> to vector<8x512xbf16>
    %c0_25 = arith.constant 0 : index
    %c0_26 = arith.constant 0 : index
    %53 = vector.load %arg8[%c0_25, %c0_26] : memref<512x128xbf16, #tpu.memory_space<vmem>>, vector<512x128xbf16>
    %cst_27 = arith.constant dense<0.000000e+00> : vector<8x128xf32>
    %54 = tpu.matmul %52, %53, %cst_27 {dimension_numbers = #tpu.dot_dimension_numbers<[1], [0], [0], [1], [0, 0, 1, 1], [], []>} : vector<8x512xbf16>, vector<512x128xbf16>, vector<8x128xf32> -> vector<8x128xf32>
    %c0_28 = arith.constant 0 : index
    %c0_29 = arith.constant 0 : index
    %55 = vector.load %arg9[%c0_28, %c0_29] : memref<1x128xf32, #tpu.memory_space<vmem>>, vector<1x128xf32>
    %56 = vector.broadcast %55 : vector<1x128xf32> to vector<8x128xf32>
    %57 = arith.addf %54, %56 : vector<8x128xf32>
    %58 = arith.negf %57 : vector<8x128xf32>
    %59 = math.exp %58 : vector<8x128xf32>
    %cst_30 = arith.constant 1.000000e+00 : f32
    %60 = vector.broadcast %cst_30 : f32 to vector<8x128xf32>
    %61 = arith.addf %60, %59 : vector<8x128xf32>
    %62 = arith.divf %60, %61 : vector<8x128xf32>
    %c72_i32_31 = arith.constant 72 : i32
    %63 = vector.broadcast %c72_i32_31 : i32 to vector<8x128xi32>
    %64 = arith.cmpi eq, %1, %63 : vector<8x128xi32>
    %65 = vector.shape_cast %30 : vector<8x1xf32> to vector<8x1xf32>
    %66 = vector.broadcast %65 : vector<8x1xf32> to vector<8x128xf32>
    %67 = arith.select %64, %66, %14 : vector<8x128xi1>, vector<8x128xf32>
    %c64_i32_32 = arith.constant 64 : i32
    %68 = vector.broadcast %c64_i32_32 : i32 to vector<8x128xi32>
    %69 = arith.cmpi slt, %1, %68 : vector<8x128xi32>
    %70 = arith.select %69, %62, %67 : vector<8x128xi1>, vector<8x128xf32>
    %c0_33 = arith.constant 0 : index
    %c0_34 = arith.constant 0 : index
    %71 = vector.load %arg10[%c0_33, %c0_34] : memref<8x128xf32, #tpu.memory_space<vmem>>, vector<8x128xf32>
    tpu.vector_store %arg10[%c0_33, %c0_34], %70 {strides = array<i32>} : memref<8x128xf32, #tpu.memory_space<vmem>>, vector<8x128xf32>,
    return
  }
  func.func @transform_0(%arg0: i32) -> (i32, i32) {
    %c0_i32 = arith.constant 0 : i32
    %c0_i32_0 = arith.constant 0 : i32
    return %arg0, %c0_i32 : i32, i32
  }
  func.func @transform_1(%arg0: i32) -> (i32, i32) {
    %c0_i32 = arith.constant 0 : i32
    %c0_i32_0 = arith.constant 0 : i32
    %c0_i32_1 = arith.constant 0 : i32
    return %c0_i32, %c0_i32_0 : i32, i32
  }
  func.func @transform_2(%arg0: i32) -> (i32, i32) {
    %c0_i32 = arith.constant 0 : i32
    %c0_i32_0 = arith.constant 0 : i32
    %c0_i32_1 = arith.constant 0 : i32
    return %c0_i32, %c0_i32_0 : i32, i32
  }
  func.func @transform_3(%arg0: i32) -> (i32, i32) {
    %c0_i32 = arith.constant 0 : i32
    %c0_i32_0 = arith.constant 0 : i32
    %c0_i32_1 = arith.constant 0 : i32
    return %c0_i32, %c0_i32_0 : i32, i32
  }
  func.func @transform_4(%arg0: i32) -> (i32, i32) {
    %c0_i32 = arith.constant 0 : i32
    %c0_i32_0 = arith.constant 0 : i32
    %c0_i32_1 = arith.constant 0 : i32
    return %c0_i32, %c0_i32_0 : i32, i32
  }
  func.func @transform_5(%arg0: i32) -> (i32, i32) {
    %c0_i32 = arith.constant 0 : i32
    %c0_i32_0 = arith.constant 0 : i32
    %c0_i32_1 = arith.constant 0 : i32
    return %c0_i32, %c0_i32_0 : i32, i32
  }
  func.func @transform_6(%arg0: i32) -> (i32, i32) {
    %c0_i32 = arith.constant 0 : i32
    %c0_i32_0 = arith.constant 0 : i32
    %c0_i32_1 = arith.constant 0 : i32
    return %c0_i32, %c0_i32_0 : i32, i32
  }
  func.func @transform_7(%arg0: i32) -> (i32, i32) {
    %c0_i32 = arith.constant 0 : i32
    %c0_i32_0 = arith.constant 0 : i32
    %c0_i32_1 = arith.constant 0 : i32
    return %c0_i32, %c0_i32_0 : i32, i32
  }
  func.func @transform_8(%arg0: i32) -> (i32, i32) {
    %c0_i32 = arith.constant 0 : i32
    %c0_i32_0 = arith.constant 0 : i32
    %c0_i32_1 = arith.constant 0 : i32
    return %c0_i32, %c0_i32_0 : i32, i32
  }
  func.func @transform_9(%arg0: i32) -> (i32, i32) {
    %c0_i32 = arith.constant 0 : i32
    %c0_i32_0 = arith.constant 0 : i32
    return %arg0, %c0_i32 : i32, i32
  }
}

</mosaic_0001>

<llo_original>
// kernel: tpu_custom_call.1
$region0: #{tpu_custom_call.1}
  #allocation0 [shape = 'u32[]', space=smem, size = 0x4, offset = 0x4, fixed_abs, tag = 'smem constant byte address 0x4 - core index']
  #allocation1 [shape = 'u32[144,128]{1,0:T(1,128)}', space=vmem, size = 0x12000, scoped, tag = 'internal scratch']
  %s0 = inlined_call_operand.hbm [shape: bf16[8,128], index: 0, kind: input, shape index: {}]
  %s1 = inlined_call_operand.hbm [shape: bf16[128,512], index: 1, kind: input, shape index: {}]
  %s2 = inlined_call_operand.hbm [shape: f32[1,512], index: 2, kind: input, shape index: {}]
  %s3 = inlined_call_operand.hbm [shape: bf16[512,128], index: 3, kind: input, shape index: {}]
  %s4 = inlined_call_operand.vmem [shape: f32[1,128], index: 4, kind: input, shape index: {}]
  %s5 = inlined_call_operand.hbm [shape: bf16[128,512], index: 5, kind: input, shape index: {}]
  %s6 = inlined_call_operand.vmem [shape: f32[1,512], index: 6, kind: input, shape index: {}]
  %s7 = inlined_call_operand.hbm [shape: bf16[512,128], index: 7, kind: input, shape index: {}]
  %s8 = inlined_call_operand.vmem [shape: f32[1,128], index: 8, kind: input, shape index: {}]
  %s9 = inlined_call_operand.hbm [shape: f32[8,128], index: 9, kind: output, shape index: {}]
  %s10 = sld [smem:[#allocation0]]
  $region70: #{tpu_custom_call.1} parent=0
    _
  %s12 = ssub.s32 1, %s10
  %s13 = scalar_select 0, %s12, %s10
  $region1: #{tpu_custom_call.1} parent=0
    #allocation2 [shape = 'u8[2048]{0}', space=vmem, size = 0x800, scoped, tag = 'input window, operand 0, single buffered']
    #allocation3 [shape = 's32[1]{0}', space=sflag, size = 0x4, scoped, tag = 'scoped memory for tpu_custom_call.1']
    #allocation4 [shape = 's32[1]{0}', space=sflag, size = 0x4, scoped, tag = 'scoped memory for tpu_custom_call.1']
    #allocation5 [shape = 'u8[131072]{0}', space=vmem, size = 0x20000, scoped, tag = 'input window, operand 1, single buffered']
    #allocation6 [shape = 's32[1]{0}', space=sflag, size = 0x4, scoped, tag = 'scoped memory for tpu_custom_call.1']
    #allocation7 [shape = 'u8[2048]{0}', space=vmem, size = 0x800, scoped, tag = 'input window, operand 2, single buffered']
    #allocation8 [shape = 'u8[131072]{0}', space=vmem, size = 0x20000, scoped, tag = 'input window, operand 3, single buffered']
    #allocation9 [shape = 's32[1]{0}', space=sflag, size = 0x4, scoped, tag = 'scoped memory for tpu_custom_call.1']
    #allocation10 [shape = 'u8[131072]{0}', space=vmem, size = 0x20000, scoped, tag = 'input window, operand 5, single buffered']
    #allocation11 [shape = 'u8[131072]{0}', space=vmem, size = 0x20000, scoped, tag = 'input window, operand 7, single buffered']
    #allocation12 [shape = 's32[1]{0}', space=sflag, size = 0x4, scoped, tag = 'scoped memory for tpu_custom_call.1']
    #allocation13 [shape = 'u8[4096]{0}', space=vmem, size = 0x1000, scoped, tag = 'output window, operand 0, single buffered']
    %14 = vsyncpa [#allocation3], 0
    %15 = vsyncpa [#allocation6], 0
    %16 = vsyncpa [#allocation9], 0
    %17 = vsyncpa [#allocation12], 0
    %18 = vsyncpa [#allocation4], 0
    // Predicated region
    $region2: #{tpu_custom_call.1} parent=1 // pred_check
      _
    $region3: #{tpu_custom_call.1} parent=1 // pred_check_branch
      %20 = sbr.rel (0) target = $region5
    $region4: #{tpu_custom_call.1} parent=1 // pred_region
      %s22 = ssub.s32 64, 64
      %23 = vsyncadd [#allocation3], %s22
      %s25 = sshll.u32 [#allocation2], 4
      %s26 = int_to_ptr.vmem [resolvable:$true] %s25
      %28 = dma.hbm_to_vmem [thread:$0]  %s0, 64, %s26, [#allocation3]
    $region5: #{tpu_custom_call.1} parent=1 // pred_fallthru
      _
    // Predicated region
    $region6: #{tpu_custom_call.1} parent=1 // pred_check
      _
    $region7: #{tpu_custom_call.1} parent=1 // pred_check_branch
      %30 = sbr.rel (0) target = $region9
    $region8: #{tpu_custom_call.1} parent=1 // pred_region
      %s32 = ssub.s32 4096, 4096
      %33 = vsyncadd [#allocation6], %s32
      %s34 = sshll.u32 [#allocation5], 4
      %s35 = int_to_ptr.vmem [resolvable:$true] %s34
      %40 = dma.hbm_to_vmem [thread:$0]  %s1, 4096, %s35, [#allocation6], 256, 256, 16
    $region9: #{tpu_custom_call.1} parent=1 // pred_fallthru
      _
    // Predicated region
    $region10: #{tpu_custom_call.1} parent=1 // pred_check
      _
    $region11: #{tpu_custom_call.1} parent=1 // pred_check_branch
      %42 = sbr.rel (0) target = $region13
    $region12: #{tpu_custom_call.1} parent=1 // pred_region
      %s44 = ssub.s32 64, 64
      %45 = vsyncadd [#allocation6], %s44
      %s47 = sshll.u32 [#allocation7], 4
      %s48 = int_to_ptr.vmem [resolvable:$true] %s47
      %50 = dma.hbm_to_vmem [thread:$0]  %s2, 64, %s48, [#allocation6]
    $region13: #{tpu_custom_call.1} parent=1 // pred_fallthru
      _
    // Predicated region
    $region14: #{tpu_custom_call.1} parent=1 // pred_check
      _
    $region15: #{tpu_custom_call.1} parent=1 // pred_check_branch
      %52 = sbr.rel (0) target = $region17
    $region16: #{tpu_custom_call.1} parent=1 // pred_region
      %s54 = ssub.s32 4096, 4096
      %55 = vsyncadd [#allocation9], %s54
      %s56 = sshll.u32 [#allocation8], 4
      %s57 = int_to_ptr.vmem [resolvable:$true] %s56
      %62 = dma.hbm_to_vmem [thread:$0]  %s3, 4096, %s57, [#allocation9], 64, 64, 4
    $region17: #{tpu_custom_call.1} parent=1 // pred_fallthru
      _
    // Predicated region
    $region18: #{tpu_custom_call.1} parent=1 // pred_check
      _
    $region19: #{tpu_custom_call.1} parent=1 // pred_check_branch
      %64 = sbr.rel (0) target = $region21
    $region20: #{tpu_custom_call.1} parent=1 // pred_region
      _
    $region21: #{tpu_custom_call.1} parent=1 // pred_fallthru
      _
    // Predicated region
    $region22: #{tpu_custom_call.1} parent=1 // pred_check
      _
    $region23: #{tpu_custom_call.1} parent=1 // pred_check_branch
      %66 = sbr.rel (0) target = $region25
    $region24: #{tpu_custom_call.1} parent=1 // pred_region
      %s68 = ssub.s32 4096, 4096
      %69 = vsyncadd [#allocation9], %s68
      %s70 = sshll.u32 [#allocation10], 4
      %s71 = int_to_ptr.vmem [resolvable:$true] %s70
      %76 = dma.hbm_to_vmem [thread:$0]  %s5, 4096, %s71, [#allocation9], 256, 256, 16
    $region25: #{tpu_custom_call.1} parent=1 // pred_fallthru
      _
    // Predicated region
    $region26: #{tpu_custom_call.1} parent=1 // pred_check
      _
    $region27: #{tpu_custom_call.1} parent=1 // pred_check_branch
      %78 = sbr.rel (0) target = $region29
    $region28: #{tpu_custom_call.1} parent=1 // pred_region
      _
    $region29: #{tpu_custom_call.1} parent=1 // pred_fallthru
      _
    // Predicated region
    $region30: #{tpu_custom_call.1} parent=1 // pred_check
      _
    $region31: #{tpu_custom_call.1} parent=1 // pred_check_branch
      %80 = sbr.rel (0) target = $region33
    $region32: #{tpu_custom_call.1} parent=1 // pred_region
      %s82 = ssub.s32 4096, 4096
      %83 = vsyncadd [#allocation12], %s82
      %s84 = sshll.u32 [#allocation11], 4
      %s85 = int_to_ptr.vmem [resolvable:$true] %s84
      %90 = dma.hbm_to_vmem [thread:$0]  %s7, 4096, %s85, [#allocation12], 64, 64, 4
    $region33: #{tpu_custom_call.1} parent=1 // pred_fallthru
      _
    // Predicated region
    $region34: #{tpu_custom_call.1} parent=1 // pred_check
      _
    $region35: #{tpu_custom_call.1} parent=1 // pred_check_branch
      %92 = sbr.rel (0) target = $region37
    $region36: #{tpu_custom_call.1} parent=1 // pred_region
      _
    $region37: #{tpu_custom_call.1} parent=1 // pred_fallthru
      _
    // Predicated region
    $region38: #{tpu_custom_call.1} parent=1 // pred_check
      _
    $region39: #{tpu_custom_call.1} parent=1 // pred_check_branch
      %94 = sbr.rel (0) target = $region41
    $region40: #{tpu_custom_call.1} parent=1 // pred_region
      %95 = dma.done [#allocation3], 64
    $region41: #{tpu_custom_call.1} parent=1 // pred_fallthru
      _
    // Predicated region
    $region42: #{tpu_custom_call.1} parent=1 // pred_check
      _
    $region43: #{tpu_custom_call.1} parent=1 // pred_check_branch
      %97 = sbr.rel (0) target = $region45
    $region44: #{tpu_custom_call.1} parent=1 // pred_region
      %98 = dma.done [#allocation6], 4096
    $region45: #{tpu_custom_call.1} parent=1 // pred_fallthru
      _
    // Predicated region
    $region46: #{tpu_custom_call.1} parent=1 // pred_check
      _
    $region47: #{tpu_custom_call.1} parent=1 // pred_check_branch
      %100 = sbr.rel (0) target = $region49
    $region48: #{tpu_custom_call.1} parent=1 // pred_region
      %101 = dma.done [#allocation6], 64
    $region49: #{tpu_custom_call.1} parent=1 // pred_fallthru
      _
    // Predicated region
    $region50: #{tpu_custom_call.1} parent=1 // pred_check
      _
    $region51: #{tpu_custom_call.1} parent=1 // pred_check_branch
      %103 = sbr.rel (0) target = $region53
    $region52: #{tpu_custom_call.1} parent=1 // pred_region
      %104 = dma.done [#allocation9], 4096
    $region53: #{tpu_custom_call.1} parent=1 // pred_fallthru
      _
    // Predicated region
    $region54: #{tpu_custom_call.1} parent=1 // pred_check
      _
    $region55: #{tpu_custom_call.1} parent=1 // pred_check_branch
      %106 = sbr.rel (0) target = $region57
    $region56: #{tpu_custom_call.1} parent=1 // pred_region
      %107 = dma.done [#allocation9], 4096
    $region57: #{tpu_custom_call.1} parent=1 // pred_fallthru
      _
    // Predicated region
    $region58: #{tpu_custom_call.1} parent=1 // pred_check
      _
    $region59: #{tpu_custom_call.1} parent=1 // pred_check_branch
      %109 = sbr.rel (0) target = $region61
    $region60: #{tpu_custom_call.1} parent=1 // pred_region
      %110 = dma.done [#allocation12], 4096
    $region61: #{tpu_custom_call.1} parent=1 // pred_fallthru
      _
    %v112 = vld [vmem:[#allocation2] sm:$0xf]
    %v113 = vlaneseq
    %v114 = vand.u32 %v113, 127
    %v115 = vld [vmem:[#allocation5] sm:$0xff]
    %v116 = vld [vmem:[#allocation5 + $0x8] sm:$0xff]
    %v117 = vld [vmem:[#allocation5 + $0x10] sm:$0xff]
    %v118 = vld [vmem:[#allocation5 + $0x18] sm:$0xff]
    %v119 = vld [vmem:[#allocation5 + $0x20] sm:$0xff]
    %v120 = vld [vmem:[#allocation5 + $0x28] sm:$0xff]
    %v121 = vld [vmem:[#allocation5 + $0x30] sm:$0xff]
    %v122 = vld [vmem:[#allocation5 + $0x38] sm:$0xff]
    %v123 = vld [vmem:[#allocation5 + $0x40] sm:$0xff]
    %v124 = vld [vmem:[#allocation5 + $0x48] sm:$0xff]
    %v125 = vld [vmem:[#allocation5 + $0x50] sm:$0xff]
    %v126 = vld [vmem:[#allocation5 + $0x58] sm:$0xff]
    %v127 = vld [vmem:[#allocation5 + $0x60] sm:$0xff]
    %v128 = vld [vmem:[#allocation5 + $0x68] sm:$0xff]
    %v129 = vld [vmem:[#allocation5 + $0x70] sm:$0xff]
    %v130 = vld [vmem:[#allocation5 + $0x78] sm:$0xff]
    %v131 = vld [vmem:[#allocation5 + $0x80] sm:$0xff]
    %v132 = vld [vmem:[#allocation5 + $0x88] sm:$0xff]
    %v133 = vld [vmem:[#allocation5 + $0x90] sm:$0xff]
    %v134 = vld [vmem:[#allocation5 + $0x98] sm:$0xff]
    %v135 = vld [vmem:[#allocation5 + $0xa0] sm:$0xff]
    %v136 = vld [vmem:[#allocation5 + $0xa8] sm:$0xff]
    %v137 = vld [vmem:[#allocation5 + $0xb0] sm:$0xff]
    %v138 = vld [vmem:[#allocation5 + $0xb8] sm:$0xff]
    %v139 = vld [vmem:[#allocation5 + $0xc0] sm:$0xff]
    %v140 = vld [vmem:[#allocation5 + $0xc8] sm:$0xff]
    %v141 = vld [vmem:[#allocation5 + $0xd0] sm:$0xff]
    %v142 = vld [vmem:[#allocation5 + $0xd8] sm:$0xff]
    %v143 = vld [vmem:[#allocation5 + $0xe0] sm:$0xff]
    %v144 = vld [vmem:[#allocation5 + $0xe8] sm:$0xff]
    %v145 = vld [vmem:[#allocation5 + $0xf0] sm:$0xff]
    %v146 = vld [vmem:[#allocation5 + $0xf8] sm:$0xff]
    %v147 = vld [vmem:[#allocation7] sm:$0xf]
    %v149 = vlaneseq
    %v150 = vshrl.u32 %v149, 7
    %v151 = vsub.s32 0, %v150
    %v152 = vrot.slane %v147, %v151
    %v153 = vlaneseq
    %v154 = vshrl.u32 %v153, 7
    %v155 = vsub.s32 1, %v154
    %v156 = vrot.slane %v147, %v155
    %v157 = vlaneseq
    %v158 = vshrl.u32 %v157, 7
    %v159 = vsub.s32 2, %v158
    %v160 = vrot.slane %v147, %v159
    %v161 = vlaneseq
    %v162 = vshrl.u32 %v161, 7
    %v163 = vsub.s32 3, %v162
    %v164 = vrot.slane %v147, %v163
    %v201 = vunpack.c.l.b16 %v115
    %v202 = vunpack.c.h.b16 %v115
    %v203 = vunpack.c.l.b16 %v116
    %v204 = vunpack.c.h.b16 %v116
    %v205 = vunpack.c.l.b16 %v117
    %v206 = vunpack.c.h.b16 %v117
    %v207 = vunpack.c.l.b16 %v118
    %v208 = vunpack.c.h.b16 %v118
    %v209 = vunpack.c.l.b16 %v119
    %v210 = vunpack.c.h.b16 %v119
    %v211 = vunpack.c.l.b16 %v120
    %v212 = vunpack.c.h.b16 %v120
    %v213 = vunpack.c.l.b16 %v121
    %v214 = vunpack.c.h.b16 %v121
    %v215 = vunpack.c.l.b16 %v122
    %v216 = vunpack.c.h.b16 %v122
    %v217 = vunpack.c.l.b16 %v123
    %v218 = vunpack.c.h.b16 %v123
    %v219 = vunpack.c.l.b16 %v124
    %v220 = vunpack.c.h.b16 %v124
    %v221 = vunpack.c.l.b16 %v125
    %v222 = vunpack.c.h.b16 %v125
    %v223 = vunpack.c.l.b16 %v126
    %v224 = vunpack.c.h.b16 %v126
    %v225 = vunpack.c.l.b16 %v127
    %v226 = vunpack.c.h.b16 %v127
    %v227 = vunpack.c.l.b16 %v128
    %v228 = vunpack.c.h.b16 %v128
    %v229 = vunpack.c.l.b16 %v129
    %v230 = vunpack.c.h.b16 %v129
    %v231 = vunpack.c.l.b16 %v130
    %v232 = vunpack.c.h.b16 %v130
    %v233 = vunpack.c.l.b16 %v131
    %v234 = vunpack.c.h.b16 %v131
    %v235 = vunpack.c.l.b16 %v132
    %v236 = vunpack.c.h.b16 %v132
    %v237 = vunpack.c.l.b16 %v133
    %v238 = vunpack.c.h.b16 %v133
    %v239 = vunpack.c.l.b16 %v134
    %v240 = vunpack.c.h.b16 %v134
    %v241 = vunpack.c.l.b16 %v135
    %v242 = vunpack.c.h.b16 %v135
    %v243 = vunpack.c.l.b16 %v136
    %v244 = vunpack.c.h.b16 %v136
    %v245 = vunpack.c.l.b16 %v137
    %v246 = vunpack.c.h.b16 %v137
    %v247 = vunpack.c.l.b16 %v138
    %v248 = vunpack.c.h.b16 %v138
    %v249 = vunpack.c.l.b16 %v139
    %v250 = vunpack.c.h.b16 %v139
    %v251 = vunpack.c.l.b16 %v140
    %v252 = vunpack.c.h.b16 %v140
    %v253 = vunpack.c.l.b16 %v141
    %v254 = vunpack.c.h.b16 %v141
    %v255 = vunpack.c.l.b16 %v142
    %v256 = vunpack.c.h.b16 %v142
    %v257 = vunpack.c.l.b16 %v143
    %v258 = vunpack.c.h.b16 %v143
    %v259 = vunpack.c.l.b16 %v144
    %v260 = vunpack.c.h.b16 %v144
    %v261 = vunpack.c.l.b16 %v145
    %v262 = vunpack.c.h.b16 %v145
    %v263 = vunpack.c.l.b16 %v146
    %v264 = vunpack.c.h.b16 %v146
    %v265 = vpack.c.b16 %v205, %v201
    %v266 = vpack.c.b16 %v206, %v202
    %v267 = vpack.c.b16 %v207, %v203
    %v268 = vpack.c.b16 %v208, %v204
    %v269 = vpack.c.b16 %v213, %v209
    %v270 = vpack.c.b16 %v214, %v210
    %v271 = vpack.c.b16 %v215, %v211
    %v272 = vpack.c.b16 %v216, %v212
    %v273 = vpack.c.b16 %v221, %v217
    %v274 = vpack.c.b16 %v222, %v218
    %v275 = vpack.c.b16 %v223, %v219
    %v276 = vpack.c.b16 %v224, %v220
    %v277 = vpack.c.b16 %v229, %v225
    %v278 = vpack.c.b16 %v230, %v226
    %v279 = vpack.c.b16 %v231, %v227
    %v280 = vpack.c.b16 %v232, %v228
    %v281 = vpack.c.b16 %v237, %v233
    %v282 = vpack.c.b16 %v238, %v234
    %v283 = vpack.c.b16 %v239, %v235
    %v284 = vpack.c.b16 %v240, %v236
    %v285 = vpack.c.b16 %v245, %v241
    %v286 = vpack.c.b16 %v246, %v242
    %v287 = vpack.c.b16 %v247, %v243
    %v288 = vpack.c.b16 %v248, %v244
    %v289 = vpack.c.b16 %v253, %v249
    %v290 = vpack.c.b16 %v254, %v250
    %v291 = vpack.c.b16 %v255, %v251
    %v292 = vpack.c.b16 %v256, %v252
    %v293 = vpack.c.b16 %v261, %v257
    %v294 = vpack.c.b16 %v262, %v258
    %v295 = vpack.c.b16 %v263, %v259
    %v296 = vpack.c.b16 %v264, %v260
    %329 = vmatprep.subr.bf16.mxu0 %v294
    %330 = vmatpush1.bf16.msra.mxu0 %v293
    %331 = vmatprep.subr.bf16.mxu0 %v290
    %332 = vmatpush1.bf16.msra.mxu0 %v289
    %333 = vmatprep.subr.bf16.mxu0 %v286
    %334 = vmatpush1.bf16.msra.mxu0 %v285
    %335 = vmatprep.subr.bf16.mxu0 %v282
    %336 = vmatpush1.bf16.msra.mxu0 %v281
    %337 = vmatprep.subr.bf16.mxu0 %v278
    %338 = vmatpush1.bf16.msra.mxu0 %v277
    %339 = vmatprep.subr.bf16.mxu0 %v274
    %340 = vmatpush1.bf16.msra.mxu0 %v273
    %341 = vmatprep.subr.bf16.mxu0 %v270
    %342 = vmatpush1.bf16.msra.mxu0 %v269
    %343 = vmatprep.subr.bf16.mxu0 %v266
    %344 = vmatpush1.bf16.msra.mxu0 %v265
    %345 = vmatprep.subr.bf16.mxu0 0
    %346 = vmatpush2.bf16.msra.mxu0 0
    %347 = vmatprep.subr.bf16.mxu0 0
    %348 = vmatpush2.bf16.msra.mxu0 0
    %349 = vmatprep.subr.bf16.mxu0 0
    %350 = vmatpush2.bf16.msra.mxu0 0
    %351 = vmatprep.subr.bf16.mxu0 0
    %352 = vmatpush2.bf16.msra.mxu0 0
    %353 = vmatprep.subr.bf16.mxu0 0
    %354 = vmatpush2.bf16.msra.mxu0 0
    %355 = vmatprep.subr.bf16.mxu0 0
    %356 = vmatpush2.bf16.msra.mxu0 0
    %357 = vmatprep.subr.bf16.mxu0 0
    %358 = vmatpush2.bf16.msra.mxu0 0
    %359 = vmatprep.subr.bf16.mxu0 0
    %360 = vmatpush2.bf16.msra.mxu0 0
    %361 = vmatprep.mubr.bf16.mxu0 0
    %362 = vmatmul.mubr.bf16.gmra.mxu0 %v112
    %v363 = vpop.f32.mrf.mxu0
    %v364 = vadd.f32 %v152, %v363
    %v365 = vpop.f32.mrf.mxu0
    %v366 = vadd.f32 %v156, %v365
    %v367 = vpop.f32.mrf.mxu0
    %v368 = vpop.f32.mrf.mxu0
    %369 = vdwg.mxu0
    %370 = vmatprep.subr.bf16.mxu0 %v296
    %371 = vmatpush1.bf16.msra.mxu0 %v295
    %372 = vmatprep.subr.bf16.mxu0 %v292
    %373 = vmatpush1.bf16.msra.mxu0 %v291
    %374 = vmatprep.subr.bf16.mxu0 %v288
    %375 = vmatpush1.bf16.msra.mxu0 %v287
    %376 = vmatprep.subr.bf16.mxu0 %v284
    %377 = vmatpush1.bf16.msra.mxu0 %v283
    %378 = vmatprep.subr.bf16.mxu0 %v280
    %379 = vmatpush1.bf16.msra.mxu0 %v279
    %380 = vmatprep.subr.bf16.mxu0 %v276
    %381 = vmatpush1.bf16.msra.mxu0 %v275
    %382 = vmatprep.subr.bf16.mxu0 %v272
    %383 = vmatpush1.bf16.msra.mxu0 %v271
    %384 = vmatprep.subr.bf16.mxu0 %v268
    %385 = vmatpush1.bf16.msra.mxu0 %v267
    %386 = vmatprep.subr.bf16.mxu0 0
    %387 = vmatpush2.bf16.msra.mxu0 0
    %388 = vmatprep.subr.bf16.mxu0 0
    %389 = vmatpush2.bf16.msra.mxu0 0
    %390 = vmatprep.subr.bf16.mxu0 0
    %391 = vmatpush2.bf16.msra.mxu0 0
    %392 = vmatprep.subr.bf16.mxu0 0
    %393 = vmatpush2.bf16.msra.mxu0 0
    %394 = vmatprep.subr.bf16.mxu0 0
    %395 = vmatpush2.bf16.msra.mxu0 0
    %396 = vmatprep.subr.bf16.mxu0 0
    %397 = vmatpush2.bf16.msra.mxu0 0
    %398 = vmatprep.subr.bf16.mxu0 0
    %399 = vmatpush2.bf16.msra.mxu0 0
    %400 = vmatprep.subr.bf16.mxu0 0
    %401 = vmatpush2.bf16.msra.mxu0 0
    %402 = vmatprep.mubr.bf16.mxu0 0
    %403 = vmatmul.mubr.bf16.gmra.mxu0 %v112
    %v404 = vpop.f32.mrf.mxu0
    %v405 = vadd.f32 %v160, %v404
    %v406 = vpop.f32.mrf.mxu0
    %v407 = vadd.f32 %v164, %v406
    %v408 = vpop.f32.mrf.mxu0
    %v409 = vpop.f32.mrf.mxu0
    %410 = vdwg.mxu0
    %v411 = vmax.f32 %v364, 0.0
    %v412 = vmax.f32 %v366, 0.0
    %v413 = vmax.f32 %v405, 0.0
    %v414 = vmax.f32 %v407, 0.0
    %v415 = vpack.c.bf16 %v411, %v411
    %v416 = vpack.c.bf16 %v412, %v412
    %v417 = vpack.c.bf16 %v413, %v413
    %v418 = vpack.c.bf16 %v414, %v414
    %v419 = vld [vmem:[#allocation8] sm:$0xf]
    %v420 = vld [vmem:[#allocation8 + $0x4] sm:$0xf]
    %v421 = vld [vmem:[#allocation8 + $0x8] sm:$0xf]
    %v422 = vld [vmem:[#allocation8 + $0xc] sm:$0xf]
    %v423 = vld [vmem:[#allocation8 + $0x10] sm:$0xf]
    %v424 = vld [vmem:[#allocation8 + $0x14] sm:$0xf]
    %v425 = vld [vmem:[#allocation8 + $0x18] sm:$0xf]
    %v426 = vld [vmem:[#allocation8 + $0x1c] sm:$0xf]
    %v427 = vld [vmem:[#allocation8 + $0x20] sm:$0xf]
    %v428 = vld [vmem:[#allocation8 + $0x24] sm:$0xf]
    %v429 = vld [vmem:[#allocation8 + $0x28] sm:$0xf]
    %v430 = vld [vmem:[#allocation8 + $0x2c] sm:$0xf]
    %v431 = vld [vmem:[#allocation8 + $0x30] sm:$0xf]
    %v432 = vld [vmem:[#allocation8 + $0x34] sm:$0xf]
    %v433 = vld [vmem:[#allocation8 + $0x38] sm:$0xf]
    %v434 = vld [vmem:[#allocation8 + $0x3c] sm:$0xf]
    %v435 = vld [vmem:[#allocation8 + $0x40] sm:$0xf]
    %v436 = vld [vmem:[#allocation8 + $0x44] sm:$0xf]
    %v437 = vld [vmem:[#allocation8 + $0x48] sm:$0xf]
    %v438 = vld [vmem:[#allocation8 + $0x4c] sm:$0xf]
    %v439 = vld [vmem:[#allocation8 + $0x50] sm:$0xf]
    %v440 = vld [vmem:[#allocation8 + $0x54] sm:$0xf]
    %v441 = vld [vmem:[#allocation8 + $0x58] sm:$0xf]
    %v442 = vld [vmem:[#allocation8 + $0x5c] sm:$0xf]
    %v443 = vld [vmem:[#allocation8 + $0x60] sm:$0xf]
    %v444 = vld [vmem:[#allocation8 + $0x64] sm:$0xf]
    %v445 = vld [vmem:[#allocation8 + $0x68] sm:$0xf]
    %v446 = vld [vmem:[#allocation8 + $0x6c] sm:$0xf]
    %v447 = vld [vmem:[#allocation8 + $0x70] sm:$0xf]
    %v448 = vld [vmem:[#allocation8 + $0x74] sm:$0xf]
    %v449 = vld [vmem:[#allocation8 + $0x78] sm:$0xf]
    %v450 = vld [vmem:[#allocation8 + $0x7c] sm:$0xf]
    %v451 = vld [vmem:[#allocation8 + $0x80] sm:$0xf]
    %v452 = vld [vmem:[#allocation8 + $0x84] sm:$0xf]
    %v453 = vld [vmem:[#allocation8 + $0x88] sm:$0xf]
    %v454 = vld [vmem:[#allocation8 + $0x8c] sm:$0xf]
    %v455 = vld [vmem:[#allocation8 + $0x90] sm:$0xf]
    %v456 = vld [vmem:[#allocation8 + $0x94] sm:$0xf]
    %v457 = vld [vmem:[#allocation8 + $0x98] sm:$0xf]
    %v458 = vld [vmem:[#allocation8 + $0x9c] sm:$0xf]
    %v459 = vld [vmem:[#allocation8 + $0xa0] sm:$0xf]
    %v460 = vld [vmem:[#allocation8 + $0xa4] sm:$0xf]
    %v461 = vld [vmem:[#allocation8 + $0xa8] sm:$0xf]
    %v462 = vld [vmem:[#allocation8 + $0xac] sm:$0xf]
    %v463 = vld [vmem:[#allocation8 + $0xb0] sm:$0xf]
    %v464 = vld [vmem:[#allocation8 + $0xb4] sm:$0xf]
    %v465 = vld [vmem:[#allocation8 + $0xb8] sm:$0xf]
    %v466 = vld [vmem:[#allocation8 + $0xbc] sm:$0xf]
    %v467 = vld [vmem:[#allocation8 + $0xc0] sm:$0xf]
    %v468 = vld [vmem:[#allocation8 + $0xc4] sm:$0xf]
    %v469 = vld [vmem:[#allocation8 + $0xc8] sm:$0xf]
    %v470 = vld [vmem:[#allocation8 + $0xcc] sm:$0xf]
    %v471 = vld [vmem:[#allocation8 + $0xd0] sm:$0xf]
    %v472 = vld [vmem:[#allocation8 + $0xd4] sm:$0xf]
    %v473 = vld [vmem:[#allocation8 + $0xd8] sm:$0xf]
    %v474 = vld [vmem:[#allocation8 + $0xdc] sm:$0xf]
    %v475 = vld [vmem:[#allocation8 + $0xe0] sm:$0xf]
    %v476 = vld [vmem:[#allocation8 + $0xe4] sm:$0xf]
    %v477 = vld [vmem:[#allocation8 + $0xe8] sm:$0xf]
    %v478 = vld [vmem:[#allocation8 + $0xec] sm:$0xf]
    %v479 = vld [vmem:[#allocation8 + $0xf0] sm:$0xf]
    %v480 = vld [vmem:[#allocation8 + $0xf4] sm:$0xf]
    %v481 = vld [vmem:[#allocation8 + $0xf8] sm:$0xf]
    %v482 = vld [vmem:[#allocation8 + $0xfc] sm:$0xf]
    %v483 = vld [vmem:[%s4] sm:$0x1]
    %v485 = vlaneseq
    %v486 = vshrl.u32 %v485, 7
    %v487 = vsub.s32 0, %v486
    %v488 = vrot.slane %v483, %v487
    %v554 = vunpack.c.l.b16 %v419
    %v555 = vunpack.c.l.b16 %v420
    %v556 = vunpack.c.l.b16 %v421
    %v557 = vunpack.c.l.b16 %v422
    %v558 = vunpack.c.l.b16 %v423
    %v559 = vunpack.c.l.b16 %v424
    %v560 = vunpack.c.l.b16 %v425
    %v561 = vunpack.c.l.b16 %v426
    %v562 = vunpack.c.l.b16 %v427
    %v563 = vunpack.c.l.b16 %v428
    %v564 = vunpack.c.l.b16 %v429
    %v565 = vunpack.c.l.b16 %v430
    %v566 = vunpack.c.l.b16 %v431
    %v567 = vunpack.c.l.b16 %v432
    %v568 = vunpack.c.l.b16 %v433
    %v569 = vunpack.c.l.b16 %v434
    %v570 = vunpack.c.l.b16 %v435
    %v571 = vunpack.c.l.b16 %v436
    %v572 = vunpack.c.l.b16 %v437
    %v573 = vunpack.c.l.b16 %v438
    %v574 = vunpack.c.l.b16 %v439
    %v575 = vunpack.c.l.b16 %v440
    %v576 = vunpack.c.l.b16 %v441
    %v577 = vunpack.c.l.b16 %v442
    %v578 = vunpack.c.l.b16 %v443
    %v579 = vunpack.c.l.b16 %v444
    %v580 = vunpack.c.l.b16 %v445
    %v581 = vunpack.c.l.b16 %v446
    %v582 = vunpack.c.l.b16 %v447
    %v583 = vunpack.c.l.b16 %v448
    %v584 = vunpack.c.l.b16 %v449
    %v585 = vunpack.c.l.b16 %v450
    %v586 = vunpack.c.l.b16 %v451
    %v587 = vunpack.c.l.b16 %v452
    %v588 = vunpack.c.l.b16 %v453
    %v589 = vunpack.c.l.b16 %v454
    %v590 = vunpack.c.l.b16 %v455
    %v591 = vunpack.c.l.b16 %v456
    %v592 = vunpack.c.l.b16 %v457
    %v593 = vunpack.c.l.b16 %v458
    %v594 = vunpack.c.l.b16 %v459
    %v595 = vunpack.c.l.b16 %v460
    %v596 = vunpack.c.l.b16 %v461
    %v597 = vunpack.c.l.b16 %v462
    %v598 = vunpack.c.l.b16 %v463
    %v599 = vunpack.c.l.b16 %v464
    %v600 = vunpack.c.l.b16 %v465
    %v601 = vunpack.c.l.b16 %v466
    %v602 = vunpack.c.l.b16 %v467
    %v603 = vunpack.c.l.b16 %v468
    %v604 = vunpack.c.l.b16 %v469
    %v605 = vunpack.c.l.b16 %v470
    %v606 = vunpack.c.l.b16 %v471
    %v607 = vunpack.c.l.b16 %v472
    %v608 = vunpack.c.l.b16 %v473
    %v609 = vunpack.c.l.b16 %v474
    %v610 = vunpack.c.l.b16 %v475
    %v611 = vunpack.c.l.b16 %v476
    %v612 = vunpack.c.l.b16 %v477
    %v613 = vunpack.c.l.b16 %v478
    %v614 = vunpack.c.l.b16 %v479
    %v615 = vunpack.c.l.b16 %v480
    %v616 = vunpack.c.l.b16 %v481
    %v617 = vunpack.c.l.b16 %v482
    %v618 = vpack.c.b16 %v555, %v554
    %v619 = vpack.c.b16 %v557, %v556
    %v620 = vpack.c.b16 %v559, %v558
    %v621 = vpack.c.b16 %v561, %v560
    %v622 = vpack.c.b16 %v563, %v562
    %v623 = vpack.c.b16 %v565, %v564
    %v624 = vpack.c.b16 %v567, %v566
    %v625 = vpack.c.b16 %v569, %v568
    %v626 = vpack.c.b16 %v571, %v570
    %v627 = vpack.c.b16 %v573, %v572
    %v628 = vpack.c.b16 %v575, %v574
    %v629 = vpack.c.b16 %v577, %v576
    %v630 = vpack.c.b16 %v579, %v578
    %v631 = vpack.c.b16 %v581, %v580
    %v632 = vpack.c.b16 %v583, %v582
    %v633 = vpack.c.b16 %v585, %v584
    %v634 = vpack.c.b16 %v587, %v586
    %v635 = vpack.c.b16 %v589, %v588
    %v636 = vpack.c.b16 %v591, %v590
    %v637 = vpack.c.b16 %v593, %v592
    %v638 = vpack.c.b16 %v595, %v594
    %v639 = vpack.c.b16 %v597, %v596
    %v640 = vpack.c.b16 %v599, %v598
    %v641 = vpack.c.b16 %v601, %v600
    %v642 = vpack.c.b16 %v603, %v602
    %v643 = vpack.c.b16 %v605, %v604
    %v644 = vpack.c.b16 %v607, %v606
    %v645 = vpack.c.b16 %v609, %v608
    %v646 = vpack.c.b16 %v611, %v610
    %v647 = vpack.c.b16 %v613, %v612
    %v648 = vpack.c.b16 %v615, %v614
    %v649 = vpack.c.b16 %v617, %v616
    %682 = vmatprep.subr.bf16.mxu0 0
    %683 = vmatpush1.bf16.msra.mxu0 %v625
    %684 = vmatprep.subr.bf16.mxu0 0
    %685 = vmatpush1.bf16.msra.mxu0 %v624
    %686 = vmatprep.subr.bf16.mxu0 0
    %687 = vmatpush1.bf16.msra.mxu0 %v623
    %688 = vmatprep.subr.bf16.mxu0 0
    %689 = vmatpush1.bf16.msra.mxu0 %v622
    %690 = vmatprep.subr.bf16.mxu0 0
    %691 = vmatpush1.bf16.msra.mxu0 %v621
    %692 = vmatprep.subr.bf16.mxu0 0
    %693 = vmatpush1.bf16.msra.mxu0 %v620
    %694 = vmatprep.subr.bf16.mxu0 0
    %695 = vmatpush1.bf16.msra.mxu0 %v619
    %696 = vmatprep.subr.bf16.mxu0 0
    %697 = vmatpush1.bf16.msra.mxu0 %v618
    %698 = vmatprep.subr.bf16.mxu0 0
    %699 = vmatpush2.bf16.msra.mxu0 %v633
    %700 = vmatprep.subr.bf16.mxu0 0
    %701 = vmatpush2.bf16.msra.mxu0 %v632
    %702 = vmatprep.subr.bf16.mxu0 0
    %703 = vmatpush2.bf16.msra.mxu0 %v631
    %704 = vmatprep.subr.bf16.mxu0 0
    %705 = vmatpush2.bf16.msra.mxu0 %v630
    %706 = vmatprep.subr.bf16.mxu0 0
    %707 = vmatpush2.bf16.msra.mxu0 %v629
    %708 = vmatprep.subr.bf16.mxu0 0
    %709 = vmatpush2.bf16.msra.mxu0 %v628
    %710 = vmatprep.subr.bf16.mxu0 0
    %711 = vmatpush2.bf16.msra.mxu0 %v627
    %712 = vmatprep.subr.bf16.mxu0 0
    %713 = vmatpush2.bf16.msra.mxu0 %v626
    %714 = vmatprep.mubr.bf16.mxu0 %v416
    %715 = vmatmul.mubr.bf16.gmra.mxu0 %v415
    %v716 = vpop.f32.mrf.mxu0
    %v717 = vadd.f32 %v488, %v716
    %v718 = vpop.f32.mrf.mxu0
    %v719 = vpop.f32.mrf.mxu0
    %v720 = vpop.f32.mrf.mxu0
    %721 = vdwg.mxu0
    %722 = vmatprep.subr.bf16.mxu0 0
    %723 = vmatpush1.bf16.msra.mxu0 %v641
    %724 = vmatprep.subr.bf16.mxu0 0
    %725 = vmatpush1.bf16.msra.mxu0 %v640
    %726 = vmatprep.subr.bf16.mxu0 0
    %727 = vmatpush1.bf16.msra.mxu0 %v639
    %728 = vmatprep.subr.bf16.mxu0 0
    %729 = vmatpush1.bf16.msra.mxu0 %v638
    %730 = vmatprep.subr.bf16.mxu0 0
    %731 = vmatpush1.bf16.msra.mxu0 %v637
    %732 = vmatprep.subr.bf16.mxu0 0
    %733 = vmatpush1.bf16.msra.mxu0 %v636
    %734 = vmatprep.subr.bf16.mxu0 0
    %735 = vmatpush1.bf16.msra.mxu0 %v635
    %736 = vmatprep.subr.bf16.mxu0 0
    %737 = vmatpush1.bf16.msra.mxu0 %v634
    %738 = vmatprep.subr.bf16.mxu0 0
    %739 = vmatpush2.bf16.msra.mxu0 %v649
    %740 = vmatprep.subr.bf16.mxu0 0
    %741 = vmatpush2.bf16.msra.mxu0 %v648
    %742 = vmatprep.subr.bf16.mxu0 0
    %743 = vmatpush2.bf16.msra.mxu0 %v647
    %744 = vmatprep.subr.bf16.mxu0 0
    %745 = vmatpush2.bf16.msra.mxu0 %v646
    %746 = vmatprep.subr.bf16.mxu0 0
    %747 = vmatpush2.bf16.msra.mxu0 %v645
    %748 = vmatprep.subr.bf16.mxu0 0
    %749 = vmatpush2.bf16.msra.mxu0 %v644
    %750 = vmatprep.subr.bf16.mxu0 0
    %751 = vmatpush2.bf16.msra.mxu0 %v643
    %752 = vmatprep.subr.bf16.mxu0 0
    %753 = vmatpush2.bf16.msra.mxu0 %v642
    %754 = vmatprep.mubr.bf16.mxu0 %v418
    %755 = vmatmul.mubr.bf16.gmra.mxu0 %v417
    %v756 = vpop.f32.mrf.mxu0
    %v757 = vadd.f32 %v717, %v756
    %v758 = vpop.f32.mrf.mxu0
    %v759 = vpop.f32.mrf.mxu0
    %v760 = vpop.f32.mrf.mxu0
    %761 = vdwg.mxu0
    %vm762 = vcmp.eq.s32.totalorder %v114, 73
    %v763 = vsel %vm762, %v757, 0.0
    %764 = vadd.xlane.f32.xlu0 %v763
    %v765 = vpop.xlane.xlu0 %764
    %vm766 = vcmp.eq.s32.totalorder %v114, 72
    %v767 = vsel %vm766, %v757, 0.0
    %768 = vadd.xlane.f32.xlu0 %v767
    %v769 = vpop.xlane.xlu0 %768
    %v770 = vmul.f32 %v765, 0.5
    %v771 = vmul.f32 %v770, 1.442695
    %v772 = vpow.pop %v771
    %v773 = vtanh.pop %v769
    %vm774 = vcmp.ge.s32.totalorder %v114, 64
    %vm775 = vcmp.lt.s32.totalorder %v114, 72
    %vm776 = vmand %vm774, %vm775
    %v777 = vunpack.c.l.bf16 %v112
    %v778 = vsel %vm776, %v777, 0.0
    %v779 = vmul.f32 %v778, %v772
    %v780 = vadd.f32 %v757, %v779
    %v781 = vsel %vm776, %v780, 0.0
    %v782 = vpack.c.bf16 %v781, %v781
    %v783 = vld [vmem:[#allocation10] sm:$0xff]
    %v784 = vld [vmem:[#allocation10 + $0x8] sm:$0xff]
    %v785 = vld [vmem:[#allocation10 + $0x10] sm:$0xff]
    %v786 = vld [vmem:[#allocation10 + $0x18] sm:$0xff]
    %v787 = vld [vmem:[#allocation10 + $0x20] sm:$0xff]
    %v788 = vld [vmem:[#allocation10 + $0x28] sm:$0xff]
    %v789 = vld [vmem:[#allocation10 + $0x30] sm:$0xff]
    %v790 = vld [vmem:[#allocation10 + $0x38] sm:$0xff]
    %v791 = vld [vmem:[#allocation10 + $0x40] sm:$0xff]
    %v792 = vld [vmem:[#allocation10 + $0x48] sm:$0xff]
    %v793 = vld [vmem:[#allocation10 + $0x50] sm:$0xff]
    %v794 = vld [vmem:[#allocation10 + $0x58] sm:$0xff]
    %v795 = vld [vmem:[#allocation10 + $0x60] sm:$0xff]
    %v796 = vld [vmem:[#allocation10 + $0x68] sm:$0xff]
    %v797 = vld [vmem:[#allocation10 + $0x70] sm:$0xff]
    %v798 = vld [vmem:[#allocation10 + $0x78] sm:$0xff]
    %v799 = vld [vmem:[#allocation10 + $0x80] sm:$0xff]
    %v800 = vld [vmem:[#allocation10 + $0x88] sm:$0xff]
    %v801 = vld [vmem:[#allocation10 + $0x90] sm:$0xff]
    %v802 = vld [vmem:[#allocation10 + $0x98] sm:$0xff]
    %v803 = vld [vmem:[#allocation10 + $0xa0] sm:$0xff]
    %v804 = vld [vmem:[#allocation10 + $0xa8] sm:$0xff]
    %v805 = vld [vmem:[#allocation10 + $0xb0] sm:$0xff]
    %v806 = vld [vmem:[#allocation10 + $0xb8] sm:$0xff]
    %v807 = vld [vmem:[#allocation10 + $0xc0] sm:$0xff]
    %v808 = vld [vmem:[#allocation10 + $0xc8] sm:$0xff]
    %v809 = vld [vmem:[#allocation10 + $0xd0] sm:$0xff]
    %v810 = vld [vmem:[#allocation10 + $0xd8] sm:$0xff]
    %v811 = vld [vmem:[#allocation10 + $0xe0] sm:$0xff]
    %v812 = vld [vmem:[#allocation10 + $0xe8] sm:$0xff]
    %v813 = vld [vmem:[#allocation10 + $0xf0] sm:$0xff]
    %v814 = vld [vmem:[#allocation10 + $0xf8] sm:$0xff]
    %v815 = vld [vmem:[%s6] sm:$0xf]
    %v817 = vlaneseq
    %v818 = vshrl.u32 %v817, 7
    %v819 = vsub.s32 0, %v818
    %v820 = vrot.slane %v815, %v819
    %v821 = vlaneseq
    %v822 = vshrl.u32 %v821, 7
    %v823 = vsub.s32 1, %v822
    %v824 = vrot.slane %v815, %v823
    %v825 = vlaneseq
    %v826 = vshrl.u32 %v825, 7
    %v827 = vsub.s32 2, %v826
    %v828 = vrot.slane %v815, %v827
    %v829 = vlaneseq
    %v830 = vshrl.u32 %v829, 7
    %v831 = vsub.s32 3, %v830
    %v832 = vrot.slane %v815, %v831
    %v869 = vunpack.c.l.b16 %v783
    %v870 = vunpack.c.h.b16 %v783
    %v871 = vunpack.c.l.b16 %v784
    %v872 = vunpack.c.h.b16 %v784
    %v873 = vunpack.c.l.b16 %v785
    %v874 = vunpack.c.h.b16 %v785
    %v875 = vunpack.c.l.b16 %v786
    %v876 = vunpack.c.h.b16 %v786
    %v877 = vunpack.c.l.b16 %v787
    %v878 = vunpack.c.h.b16 %v787
    %v879 = vunpack.c.l.b16 %v788
    %v880 = vunpack.c.h.b16 %v788
    %v881 = vunpack.c.l.b16 %v789
    %v882 = vunpack.c.h.b16 %v789
    %v883 = vunpack.c.l.b16 %v790
    %v884 = vunpack.c.h.b16 %v790
    %v885 = vunpack.c.l.b16 %v791
    %v886 = vunpack.c.h.b16 %v791
    %v887 = vunpack.c.l.b16 %v792
    %v888 = vunpack.c.h.b16 %v792
    %v889 = vunpack.c.l.b16 %v793
    %v890 = vunpack.c.h.b16 %v793
    %v891 = vunpack.c.l.b16 %v794
    %v892 = vunpack.c.h.b16 %v794
    %v893 = vunpack.c.l.b16 %v795
    %v894 = vunpack.c.h.b16 %v795
    %v895 = vunpack.c.l.b16 %v796
    %v896 = vunpack.c.h.b16 %v796
    %v897 = vunpack.c.l.b16 %v797
    %v898 = vunpack.c.h.b16 %v797
    %v899 = vunpack.c.l.b16 %v798
    %v900 = vunpack.c.h.b16 %v798
    %v901 = vunpack.c.l.b16 %v799
    %v902 = vunpack.c.h.b16 %v799
    %v903 = vunpack.c.l.b16 %v800
    %v904 = vunpack.c.h.b16 %v800
    %v905 = vunpack.c.l.b16 %v801
    %v906 = vunpack.c.h.b16 %v801
    %v907 = vunpack.c.l.b16 %v802
    %v908 = vunpack.c.h.b16 %v802
    %v909 = vunpack.c.l.b16 %v803
    %v910 = vunpack.c.h.b16 %v803
    %v911 = vunpack.c.l.b16 %v804
    %v912 = vunpack.c.h.b16 %v804
    %v913 = vunpack.c.l.b16 %v805
    %v914 = vunpack.c.h.b16 %v805
    %v915 = vunpack.c.l.b16 %v806
    %v916 = vunpack.c.h.b16 %v806
    %v917 = vunpack.c.l.b16 %v807
    %v918 = vunpack.c.h.b16 %v807
    %v919 = vunpack.c.l.b16 %v808
    %v920 = vunpack.c.h.b16 %v808
    %v921 = vunpack.c.l.b16 %v809
    %v922 = vunpack.c.h.b16 %v809
    %v923 = vunpack.c.l.b16 %v810
    %v924 = vunpack.c.h.b16 %v810
    %v925 = vunpack.c.l.b16 %v811
    %v926 = vunpack.c.h.b16 %v811
    %v927 = vunpack.c.l.b16 %v812
    %v928 = vunpack.c.h.b16 %v812
    %v929 = vunpack.c.l.b16 %v813
    %v930 = vunpack.c.h.b16 %v813
    %v931 = vunpack.c.l.b16 %v814
    %v932 = vunpack.c.h.b16 %v814
    %v933 = vpack.c.b16 %v873, %v869
    %v934 = vpack.c.b16 %v874, %v870
    %v935 = vpack.c.b16 %v875, %v871
    %v936 = vpack.c.b16 %v876, %v872
    %v937 = vpack.c.b16 %v881, %v877
    %v938 = vpack.c.b16 %v882, %v878
    %v939 = vpack.c.b16 %v883, %v879
    %v940 = vpack.c.b16 %v884, %v880
    %v941 = vpack.c.b16 %v889, %v885
    %v942 = vpack.c.b16 %v890, %v886
    %v943 = vpack.c.b16 %v891, %v887
    %v944 = vpack.c.b16 %v892, %v888
    %v945 = vpack.c.b16 %v897, %v893
    %v946 = vpack.c.b16 %v898, %v894
    %v947 = vpack.c.b16 %v899, %v895
    %v948 = vpack.c.b16 %v900, %v896
    %v949 = vpack.c.b16 %v905, %v901
    %v950 = vpack.c.b16 %v906, %v902
    %v951 = vpack.c.b16 %v907, %v903
    %v952 = vpack.c.b16 %v908, %v904
    %v953 = vpack.c.b16 %v913, %v909
    %v954 = vpack.c.b16 %v914, %v910
    %v955 = vpack.c.b16 %v915, %v911
    %v956 = vpack.c.b16 %v916, %v912
    %v957 = vpack.c.b16 %v921, %v917
    %v958 = vpack.c.b16 %v922, %v918
    %v959 = vpack.c.b16 %v923, %v919
    %v960 = vpack.c.b16 %v924, %v920
    %v961 = vpack.c.b16 %v929, %v925
    %v962 = vpack.c.b16 %v930, %v926
    %v963 = vpack.c.b16 %v931, %v927
    %v964 = vpack.c.b16 %v932, %v928
    %997 = vmatprep.subr.bf16.mxu0 %v962
    %998 = vmatpush1.bf16.msra.mxu0 %v961
    %999 = vmatprep.subr.bf16.mxu0 %v958
    %1000 = vmatpush1.bf16.msra.mxu0 %v957
    %1001 = vmatprep.subr.bf16.mxu0 %v954
    %1002 = vmatpush1.bf16.msra.mxu0 %v953
    %1003 = vmatprep.subr.bf16.mxu0 %v950
    %1004 = vmatpush1.bf16.msra.mxu0 %v949
    %1005 = vmatprep.subr.bf16.mxu0 %v946
    %1006 = vmatpush1.bf16.msra.mxu0 %v945
    %1007 = vmatprep.subr.bf16.mxu0 %v942
    %1008 = vmatpush1.bf16.msra.mxu0 %v941
    %1009 = vmatprep.subr.bf16.mxu0 %v938
    %1010 = vmatpush1.bf16.msra.mxu0 %v937
    %1011 = vmatprep.subr.bf16.mxu0 %v934
    %1012 = vmatpush1.bf16.msra.mxu0 %v933
    %1013 = vmatprep.subr.bf16.mxu0 0
    %1014 = vmatpush2.bf16.msra.mxu0 0
    %1015 = vmatprep.subr.bf16.mxu0 0
    %1016 = vmatpush2.bf16.msra.mxu0 0
    %1017 = vmatprep.subr.bf16.mxu0 0
    %1018 = vmatpush2.bf16.msra.mxu0 0
    %1019 = vmatprep.subr.bf16.mxu0 0
    %1020 = vmatpush2.bf16.msra.mxu0 0
    %1021 = vmatprep.subr.bf16.mxu0 0
    %1022 = vmatpush2.bf16.msra.mxu0 0
    %1023 = vmatprep.subr.bf16.mxu0 0
    %1024 = vmatpush2.bf16.msra.mxu0 0
    %1025 = vmatprep.subr.bf16.mxu0 0
    %1026 = vmatpush2.bf16.msra.mxu0 0
    %1027 = vmatprep.subr.bf16.mxu0 0
    %1028 = vmatpush2.bf16.msra.mxu0 0
    %1029 = vmatprep.mubr.bf16.mxu0 0
    %1030 = vmatmul.mubr.bf16.gmra.mxu0 %v782
    %v1031 = vpop.f32.mrf.mxu0
    %v1032 = vadd.f32 %v820, %v1031
    %v1033 = vpop.f32.mrf.mxu0
    %v1034 = vadd.f32 %v824, %v1033
    %v1035 = vpop.f32.mrf.mxu0
    %v1036 = vpop.f32.mrf.mxu0
    %1037 = vdwg.mxu0
    %1038 = vmatprep.subr.bf16.mxu0 %v964
    %1039 = vmatpush1.bf16.msra.mxu0 %v963
    %1040 = vmatprep.subr.bf16.mxu0 %v960
    %1041 = vmatpush1.bf16.msra.mxu0 %v959
    %1042 = vmatprep.subr.bf16.mxu0 %v956
    %1043 = vmatpush1.bf16.msra.mxu0 %v955
    %1044 = vmatprep.subr.bf16.mxu0 %v952
    %1045 = vmatpush1.bf16.msra.mxu0 %v951
    %1046 = vmatprep.subr.bf16.mxu0 %v948
    %1047 = vmatpush1.bf16.msra.mxu0 %v947
    %1048 = vmatprep.subr.bf16.mxu0 %v944
    %1049 = vmatpush1.bf16.msra.mxu0 %v943
    %1050 = vmatprep.subr.bf16.mxu0 %v940
    %1051 = vmatpush1.bf16.msra.mxu0 %v939
    %1052 = vmatprep.subr.bf16.mxu0 %v936
    %1053 = vmatpush1.bf16.msra.mxu0 %v935
    %1054 = vmatprep.subr.bf16.mxu0 0
    %1055 = vmatpush2.bf16.msra.mxu0 0
    %1056 = vmatprep.subr.bf16.mxu0 0
    %1057 = vmatpush2.bf16.msra.mxu0 0
    %1058 = vmatprep.subr.bf16.mxu0 0
    %1059 = vmatpush2.bf16.msra.mxu0 0
    %1060 = vmatprep.subr.bf16.mxu0 0
    %1061 = vmatpush2.bf16.msra.mxu0 0
    %1062 = vmatprep.subr.bf16.mxu0 0
    %1063 = vmatpush2.bf16.msra.mxu0 0
    %1064 = vmatprep.subr.bf16.mxu0 0
    %1065 = vmatpush2.bf16.msra.mxu0 0
    %1066 = vmatprep.subr.bf16.mxu0 0
    %1067 = vmatpush2.bf16.msra.mxu0 0
    %1068 = vmatprep.subr.bf16.mxu0 0
    %1069 = vmatpush2.bf16.msra.mxu0 0
    %1070 = vmatprep.mubr.bf16.mxu0 0
    %1071 = vmatmul.mubr.bf16.gmra.mxu0 %v782
    %v1072 = vpop.f32.mrf.mxu0
    %v1073 = vadd.f32 %v828, %v1072
    %v1074 = vpop.f32.mrf.mxu0
    %v1075 = vadd.f32 %v832, %v1074
    %v1076 = vpop.f32.mrf.mxu0
    %v1077 = vpop.f32.mrf.mxu0
    %1078 = vdwg.mxu0
    %v1079 = vmax.f32 %v1032, 0.0
    %v1080 = vmax.f32 %v1034, 0.0
    %v1081 = vmax.f32 %v1073, 0.0
    %v1082 = vmax.f32 %v1075, 0.0
    %v1083 = vpack.c.bf16 %v1079, %v1079
    %v1084 = vpack.c.bf16 %v1080, %v1080
    %v1085 = vpack.c.bf16 %v1081, %v1081
    %v1086 = vpack.c.bf16 %v1082, %v1082
    %v1087 = vld [vmem:[#allocation11] sm:$0xf]
    %v1088 = vld [vmem:[#allocation11 + $0x4] sm:$0xf]
    %v1089 = vld [vmem:[#allocation11 + $0x8] sm:$0xf]
    %v1090 = vld [vmem:[#allocation11 + $0xc] sm:$0xf]
    %v1091 = vld [vmem:[#allocation11 + $0x10] sm:$0xf]
    %v1092 = vld [vmem:[#allocation11 + $0x14] sm:$0xf]
    %v1093 = vld [vmem:[#allocation11 + $0x18] sm:$0xf]
    %v1094 = vld [vmem:[#allocation11 + $0x1c] sm:$0xf]
    %v1095 = vld [vmem:[#allocation11 + $0x20] sm:$0xf]
    %v1096 = vld [vmem:[#allocation11 + $0x24] sm:$0xf]
    %v1097 = vld [vmem:[#allocation11 + $0x28] sm:$0xf]
    %v1098 = vld [vmem:[#allocation11 + $0x2c] sm:$0xf]
    %v1099 = vld [vmem:[#allocation11 + $0x30] sm:$0xf]
    %v1100 = vld [vmem:[#allocation11 + $0x34] sm:$0xf]
    %v1101 = vld [vmem:[#allocation11 + $0x38] sm:$0xf]
    %v1102 = vld [vmem:[#allocation11 + $0x3c] sm:$0xf]
    %v1103 = vld [vmem:[#allocation11 + $0x40] sm:$0xf]
    %v1104 = vld [vmem:[#allocation11 + $0x44] sm:$0xf]
    %v1105 = vld [vmem:[#allocation11 + $0x48] sm:$0xf]
    %v1106 = vld [vmem:[#allocation11 + $0x4c] sm:$0xf]
    %v1107 = vld [vmem:[#allocation11 + $0x50] sm:$0xf]
    %v1108 = vld [vmem:[#allocation11 + $0x54] sm:$0xf]
    %v1109 = vld [vmem:[#allocation11 + $0x58] sm:$0xf]
    %v1110 = vld [vmem:[#allocation11 + $0x5c] sm:$0xf]
    %v1111 = vld [vmem:[#allocation11 + $0x60] sm:$0xf]
    %v1112 = vld [vmem:[#allocation11 + $0x64] sm:$0xf]
    %v1113 = vld [vmem:[#allocation11 + $0x68] sm:$0xf]
    %v1114 = vld [vmem:[#allocation11 + $0x6c] sm:$0xf]
    %v1115 = vld [vmem:[#allocation11 + $0x70] sm:$0xf]
    %v1116 = vld [vmem:[#allocation11 + $0x74] sm:$0xf]
    %v1117 = vld [vmem:[#allocation11 + $0x78] sm:$0xf]
    %v1118 = vld [vmem:[#allocation11 + $0x7c] sm:$0xf]
    %v1119 = vld [vmem:[#allocation11 + $0x80] sm:$0xf]
    %v1120 = vld [vmem:[#allocation11 + $0x84] sm:$0xf]
    %v1121 = vld [vmem:[#allocation11 + $0x88] sm:$0xf]
    %v1122 = vld [vmem:[#allocation11 + $0x8c] sm:$0xf]
    %v1123 = vld [vmem:[#allocation11 + $0x90] sm:$0xf]
    %v1124 = vld [vmem:[#allocation11 + $0x94] sm:$0xf]
    %v1125 = vld [vmem:[#allocation11 + $0x98] sm:$0xf]
    %v1126 = vld [vmem:[#allocation11 + $0x9c] sm:$0xf]
    %v1127 = vld [vmem:[#allocation11 + $0xa0] sm:$0xf]
    %v1128 = vld [vmem:[#allocation11 + $0xa4] sm:$0xf]
    %v1129 = vld [vmem:[#allocation11 + $0xa8] sm:$0xf]
    %v1130 = vld [vmem:[#allocation11 + $0xac] sm:$0xf]
    %v1131 = vld [vmem:[#allocation11 + $0xb0] sm:$0xf]
    %v1132 = vld [vmem:[#allocation11 + $0xb4] sm:$0xf]
    %v1133 = vld [vmem:[#allocation11 + $0xb8] sm:$0xf]
    %v1134 = vld [vmem:[#allocation11 + $0xbc] sm:$0xf]
    %v1135 = vld [vmem:[#allocation11 + $0xc0] sm:$0xf]
    %v1136 = vld [vmem:[#allocation11 + $0xc4] sm:$0xf]
    %v1137 = vld [vmem:[#allocation11 + $0xc8] sm:$0xf]
    %v1138 = vld [vmem:[#allocation11 + $0xcc] sm:$0xf]
    %v1139 = vld [vmem:[#allocation11 + $0xd0] sm:$0xf]
    %v1140 = vld [vmem:[#allocation11 + $0xd4] sm:$0xf]
    %v1141 = vld [vmem:[#allocation11 + $0xd8] sm:$0xf]
    %v1142 = vld [vmem:[#allocation11 + $0xdc] sm:$0xf]
    %v1143 = vld [vmem:[#allocation11 + $0xe0] sm:$0xf]
    %v1144 = vld [vmem:[#allocation11 + $0xe4] sm:$0xf]
    %v1145 = vld [vmem:[#allocation11 + $0xe8] sm:$0xf]
    %v1146 = vld [vmem:[#allocation11 + $0xec] sm:$0xf]
    %v1147 = vld [vmem:[#allocation11 + $0xf0] sm:$0xf]
    %v1148 = vld [vmem:[#allocation11 + $0xf4] sm:$0xf]
    %v1149 = vld [vmem:[#allocation11 + $0xf8] sm:$0xf]
    %v1150 = vld [vmem:[#allocation11 + $0xfc] sm:$0xf]
    %v1151 = vld [vmem:[%s8] sm:$0x1]
    %v1153 = vlaneseq
    %v1154 = vshrl.u32 %v1153, 7
    %v1155 = vsub.s32 0, %v1154
    %v1156 = vrot.slane %v1151, %v1155
    %v1222 = vunpack.c.l.b16 %v1087
    %v1223 = vunpack.c.l.b16 %v1088
    %v1224 = vunpack.c.l.b16 %v1089
    %v1225 = vunpack.c.l.b16 %v1090
    %v1226 = vunpack.c.l.b16 %v1091
    %v1227 = vunpack.c.l.b16 %v1092
    %v1228 = vunpack.c.l.b16 %v1093
    %v1229 = vunpack.c.l.b16 %v1094
    %v1230 = vunpack.c.l.b16 %v1095
    %v1231 = vunpack.c.l.b16 %v1096
    %v1232 = vunpack.c.l.b16 %v1097
    %v1233 = vunpack.c.l.b16 %v1098
    %v1234 = vunpack.c.l.b16 %v1099
    %v1235 = vunpack.c.l.b16 %v1100
    %v1236 = vunpack.c.l.b16 %v1101
    %v1237 = vunpack.c.l.b16 %v1102
    %v1238 = vunpack.c.l.b16 %v1103
    %v1239 = vunpack.c.l.b16 %v1104
    %v1240 = vunpack.c.l.b16 %v1105
    %v1241 = vunpack.c.l.b16 %v1106
    %v1242 = vunpack.c.l.b16 %v1107
    %v1243 = vunpack.c.l.b16 %v1108
    %v1244 = vunpack.c.l.b16 %v1109
    %v1245 = vunpack.c.l.b16 %v1110
    %v1246 = vunpack.c.l.b16 %v1111
    %v1247 = vunpack.c.l.b16 %v1112
    %v1248 = vunpack.c.l.b16 %v1113
    %v1249 = vunpack.c.l.b16 %v1114
    %v1250 = vunpack.c.l.b16 %v1115
    %v1251 = vunpack.c.l.b16 %v1116
    %v1252 = vunpack.c.l.b16 %v1117
    %v1253 = vunpack.c.l.b16 %v1118
    %v1254 = vunpack.c.l.b16 %v1119
    %v1255 = vunpack.c.l.b16 %v1120
    %v1256 = vunpack.c.l.b16 %v1121
    %v1257 = vunpack.c.l.b16 %v1122
    %v1258 = vunpack.c.l.b16 %v1123
    %v1259 = vunpack.c.l.b16 %v1124
    %v1260 = vunpack.c.l.b16 %v1125
    %v1261 = vunpack.c.l.b16 %v1126
    %v1262 = vunpack.c.l.b16 %v1127
    %v1263 = vunpack.c.l.b16 %v1128
    %v1264 = vunpack.c.l.b16 %v1129
    %v1265 = vunpack.c.l.b16 %v1130
    %v1266 = vunpack.c.l.b16 %v1131
    %v1267 = vunpack.c.l.b16 %v1132
    %v1268 = vunpack.c.l.b16 %v1133
    %v1269 = vunpack.c.l.b16 %v1134
    %v1270 = vunpack.c.l.b16 %v1135
    %v1271 = vunpack.c.l.b16 %v1136
    %v1272 = vunpack.c.l.b16 %v1137
    %v1273 = vunpack.c.l.b16 %v1138
    %v1274 = vunpack.c.l.b16 %v1139
    %v1275 = vunpack.c.l.b16 %v1140
    %v1276 = vunpack.c.l.b16 %v1141
    %v1277 = vunpack.c.l.b16 %v1142
    %v1278 = vunpack.c.l.b16 %v1143
    %v1279 = vunpack.c.l.b16 %v1144
    %v1280 = vunpack.c.l.b16 %v1145
    %v1281 = vunpack.c.l.b16 %v1146
    %v1282 = vunpack.c.l.b16 %v1147
    %v1283 = vunpack.c.l.b16 %v1148
    %v1284 = vunpack.c.l.b16 %v1149
    %v1285 = vunpack.c.l.b16 %v1150
    %v1286 = vpack.c.b16 %v1223, %v1222
    %v1287 = vpack.c.b16 %v1225, %v1224
    %v1288 = vpack.c.b16 %v1227, %v1226
    %v1289 = vpack.c.b16 %v1229, %v1228
    %v1290 = vpack.c.b16 %v1231, %v1230
    %v1291 = vpack.c.b16 %v1233, %v1232
    %v1292 = vpack.c.b16 %v1235, %v1234
    %v1293 = vpack.c.b16 %v1237, %v1236
    %v1294 = vpack.c.b16 %v1239, %v1238
    %v1295 = vpack.c.b16 %v1241, %v1240
    %v1296 = vpack.c.b16 %v1243, %v1242
    %v1297 = vpack.c.b16 %v1245, %v1244
    %v1298 = vpack.c.b16 %v1247, %v1246
    %v1299 = vpack.c.b16 %v1249, %v1248
    %v1300 = vpack.c.b16 %v1251, %v1250
    %v1301 = vpack.c.b16 %v1253, %v1252
    %v1302 = vpack.c.b16 %v1255, %v1254
    %v1303 = vpack.c.b16 %v1257, %v1256
    %v1304 = vpack.c.b16 %v1259, %v1258
    %v1305 = vpack.c.b16 %v1261, %v1260
    %v1306 = vpack.c.b16 %v1263, %v1262
    %v1307 = vpack.c.b16 %v1265, %v1264
    %v1308 = vpack.c.b16 %v1267, %v1266
    %v1309 = vpack.c.b16 %v1269, %v1268
    %v1310 = vpack.c.b16 %v1271, %v1270
    %v1311 = vpack.c.b16 %v1273, %v1272
    %v1312 = vpack.c.b16 %v1275, %v1274
    %v1313 = vpack.c.b16 %v1277, %v1276
    %v1314 = vpack.c.b16 %v1279, %v1278
    %v1315 = vpack.c.b16 %v1281, %v1280
    %v1316 = vpack.c.b16 %v1283, %v1282
    %v1317 = vpack.c.b16 %v1285, %v1284
    %1350 = vmatprep.subr.bf16.mxu0 0
    %1351 = vmatpush1.bf16.msra.mxu0 %v1293
    %1352 = vmatprep.subr.bf16.mxu0 0
    %1353 = vmatpush1.bf16.msra.mxu0 %v1292
    %1354 = vmatprep.subr.bf16.mxu0 0
    %1355 = vmatpush1.bf16.msra.mxu0 %v1291
    %1356 = vmatprep.subr.bf16.mxu0 0
    %1357 = vmatpush1.bf16.msra.mxu0 %v1290
    %1358 = vmatprep.subr.bf16.mxu0 0
    %1359 = vmatpush1.bf16.msra.mxu0 %v1289
    %1360 = vmatprep.subr.bf16.mxu0 0
    %1361 = vmatpush1.bf16.msra.mxu0 %v1288
    %1362 = vmatprep.subr.bf16.mxu0 0
    %1363 = vmatpush1.bf16.msra.mxu0 %v1287
    %1364 = vmatprep.subr.bf16.mxu0 0
    %1365 = vmatpush1.bf16.msra.mxu0 %v1286
    %1366 = vmatprep.subr.bf16.mxu0 0
    %1367 = vmatpush2.bf16.msra.mxu0 %v1301
    %1368 = vmatprep.subr.bf16.mxu0 0
    %1369 = vmatpush2.bf16.msra.mxu0 %v1300
    %1370 = vmatprep.subr.bf16.mxu0 0
    %1371 = vmatpush2.bf16.msra.mxu0 %v1299
    %1372 = vmatprep.subr.bf16.mxu0 0
    %1373 = vmatpush2.bf16.msra.mxu0 %v1298
    %1374 = vmatprep.subr.bf16.mxu0 0
    %1375 = vmatpush2.bf16.msra.mxu0 %v1297
    %1376 = vmatprep.subr.bf16.mxu0 0
    %1377 = vmatpush2.bf16.msra.mxu0 %v1296
    %1378 = vmatprep.subr.bf16.mxu0 0
    %1379 = vmatpush2.bf16.msra.mxu0 %v1295
    %1380 = vmatprep.subr.bf16.mxu0 0
    %1381 = vmatpush2.bf16.msra.mxu0 %v1294
    %1382 = vmatprep.mubr.bf16.mxu0 %v1084
    %1383 = vmatmul.mubr.bf16.gmra.mxu0 %v1083
    %v1384 = vpop.f32.mrf.mxu0
    %v1385 = vadd.f32 %v1156, %v1384
    %v1386 = vpop.f32.mrf.mxu0
    %v1387 = vpop.f32.mrf.mxu0
    %v1388 = vpop.f32.mrf.mxu0
    %1389 = vdwg.mxu0
    %1390 = vmatprep.subr.bf16.mxu0 0
    %1391 = vmatpush1.bf16.msra.mxu0 %v1309
    %1392 = vmatprep.subr.bf16.mxu0 0
    %1393 = vmatpush1.bf16.msra.mxu0 %v1308
    %1394 = vmatprep.subr.bf16.mxu0 0
    %1395 = vmatpush1.bf16.msra.mxu0 %v1307
    %1396 = vmatprep.subr.bf16.mxu0 0
    %1397 = vmatpush1.bf16.msra.mxu0 %v1306
    %1398 = vmatprep.subr.bf16.mxu0 0
    %1399 = vmatpush1.bf16.msra.mxu0 %v1305
    %1400 = vmatprep.subr.bf16.mxu0 0
    %1401 = vmatpush1.bf16.msra.mxu0 %v1304
    %1402 = vmatprep.subr.bf16.mxu0 0
    %1403 = vmatpush1.bf16.msra.mxu0 %v1303
    %1404 = vmatprep.subr.bf16.mxu0 0
    %1405 = vmatpush1.bf16.msra.mxu0 %v1302
    %1406 = vmatprep.subr.bf16.mxu0 0
    %1407 = vmatpush2.bf16.msra.mxu0 %v1317
    %1408 = vmatprep.subr.bf16.mxu0 0
    %1409 = vmatpush2.bf16.msra.mxu0 %v1316
    %1410 = vmatprep.subr.bf16.mxu0 0
    %1411 = vmatpush2.bf16.msra.mxu0 %v1315
    %1412 = vmatprep.subr.bf16.mxu0 0
    %1413 = vmatpush2.bf16.msra.mxu0 %v1314
    %1414 = vmatprep.subr.bf16.mxu0 0
    %1415 = vmatpush2.bf16.msra.mxu0 %v1313
    %1416 = vmatprep.subr.bf16.mxu0 0
    %1417 = vmatpush2.bf16.msra.mxu0 %v1312
    %1418 = vmatprep.subr.bf16.mxu0 0
    %1419 = vmatpush2.bf16.msra.mxu0 %v1311
    %1420 = vmatprep.subr.bf16.mxu0 0
    %1421 = vmatpush2.bf16.msra.mxu0 %v1310
    %1422 = vmatprep.mubr.bf16.mxu0 %v1086
    %1423 = vmatmul.mubr.bf16.gmra.mxu0 %v1085
    %v1424 = vpop.f32.mrf.mxu0
    %v1425 = vadd.f32 %v1385, %v1424
    %v1426 = vpop.f32.mrf.mxu0
    %v1427 = vpop.f32.mrf.mxu0
    %v1428 = vpop.f32.mrf.mxu0
    %1429 = vdwg.mxu0
    %v1430 = vxor.u32 %v1425, 2147483648
    %v1431 = vmul.f32 %v1430, 1.442695
    %v1432 = vpow.pop %v1431
    %v1433 = vadd.f32 %v1432, 1.0
    %v1434 = vrcp.pop %v1433
    %v1435 = vmul.f32 1.0, %v1434
    %v1436 = vsel %vm766, %v773, %v757
    %vm1437 = vcmp.lt.s32.totalorder %v114, 64
    %v1438 = vsel %vm1437, %v1435, %v1436
    %1439 = vst [vmem:[#allocation13] sm:$0xff] %v1438
    // Predicated region
    $region62: #{tpu_custom_call.1} parent=1 // pred_check
      _
    $region63: #{tpu_custom_call.1} parent=1 // pred_check_branch
      %1441 = sbr.rel (0) target = $region65
    $region64: #{tpu_custom_call.1} parent=1 // pred_region
      %s1443 = ssub.s32 128, 128
      %1444 = vsyncadd [#allocation4], %s1443
      %s1446 = sshll.u32 [#allocation13], 4
      %s1447 = int_to_ptr.vmem [resolvable:$true] %s1446
      %1449 = dma.vmem_to_hbm [thread:$0]  %s1447, 128, %s9, [#allocation4]
    $region65: #{tpu_custom_call.1} parent=1 // pred_fallthru
      _
    // Predicated region
    $region66: #{tpu_custom_call.1} parent=1 // pred_check
      _
    $region67: #{tpu_custom_call.1} parent=1 // pred_check_branch
      %1451 = sbr.rel (0) target = $region69
    $region68: #{tpu_custom_call.1} parent=1 // pred_region
      %1452 = dma.done [#allocation4], 128
    $region69: #{tpu_custom_call.1} parent=1 // pred_fallthru
      _
    %1453 = vsyncpa [#allocation3], 1
    %1454 = vsyncpa [#allocation6], 1
    %1455 = vsyncpa [#allocation9], 1
    %1456 = vsyncpa [#allocation12], 1
    %1457 = vsyncpa [#allocation4], 1

</llo_original>
